<compile_context>
chip_gen: v5e
topology: v5e:2x2
jax: 0.10.0
libtpu: 0.0.40
codegen_flags: <defaults>
</compile_context>

<pallas_src>
from functools import partial

import jax
import jax.numpy as jnp
from jax.experimental import pallas as pl
from jax.experimental.pallas import tpu as pltpu

TEMPERATURE = 0.1
LANE = 128
BLOCK_BUDGET_BYTES = 8 * 1024 * 1024      # per patch block (lane-padded, bf16)
VMEM_LIMIT_BYTES = 48 * 1024 * 1024       # <= v7x 64 MiB/TC; plenty of headroom on v5e/v6e


def _round_up(x, m):
    return ((x + m - 1) // m) * m


def _pick_divisor_tile(total, cap):
    """Largest multiple-of-16 divisor of `total` that is <= cap (total is a multiple of 16)."""
    best = 16
    for d in range(16, min(total, cap) + 1, 16):
        if total % d == 0:
            best = d
    return best


# -------- kernel 1: conv-as-matmul + bias + ReLU + accumulated global average pool --------
def backbone_kernel(p_ref, w_ref, b_ref, o_ref, *, inv_s, s_true, mask_spatial):
    # p_ref: (TB, TS, P=C*9) bf16 im2col patches; w_ref: (P, Cp) bf16; b_ref: (1, Cp) f32
    # o_ref: (TB, Cp) f32 — doubles as the spatial-sum accumulator (block index constant in j)
    j = pl.program_id(1)

    @pl.when(j == 0)
    def _():
        o_ref[...] = jnp.zeros_like(o_ref)

    tb, ts, p = p_ref.shape
    p2d = p_ref[...].reshape(tb * ts, p)                                   # bf16, layout-trivial
    y = jnp.dot(p2d, w_ref[...], preferred_element_type=jnp.float32)      # MXU, f32 acc
    y = jnp.maximum(y + b_ref[...], 0.0)                                  # bias + ReLU in f32
    y3 = y.reshape(tb, ts, -1)
    if mask_spatial:                                                       # only if S was padded
        sp = j * ts + jax.lax.broadcasted_iota(jnp.int32, (1, ts, 1), 1)
        y3 = jnp.where(sp < s_true, y3, 0.0)
    o_ref[...] += jnp.sum(y3, axis=1)                                      # per-batch spatial sum

    @pl.when(j == pl.num_programs(1) - 1)
    def _():
        o_ref[...] = o_ref[...] * inv_s                                    # finalize: mean pool


# -------- kernel 2: neck MLP (2-layer) + L2 normalize, row-tiled, bf16 MXU operands --------
def neck_kernel(f_ref, w1_ref, b1_ref, w2_ref, b2_ref, z_ref):
    f = f_ref[...].astype(jnp.bfloat16)                                    # (TR, Cp)
    h = jnp.dot(f, w1_ref[...], preferred_element_type=jnp.float32) + b1_ref[...]
    h = jnp.maximum(h, 0.0)
    zz = jnp.dot(h.astype(jnp.bfloat16), w2_ref[...],
                 preferred_element_type=jnp.float32) + b2_ref[...]
    # L2 normalize matching torch: z / (||z||_2 + 1e-10); reciprocal on the EUP (approx).
    norm = jnp.sqrt(jnp.sum(zz * zz, axis=1, keepdims=True))
    z = zz * pl.reciprocal(norm + 1e-10, approx=True)
    z_ref[...] = z.astype(z_ref.dtype)                                     # bf16 out


# -------- kernel 3: NT-Xent loss, gridded over query-row tiles, masks from iota --------
def loss_kernel(z_ref, out_ref, *, b2, tq, inv_temp):
    # z_ref: full (B2p, Dp) bf16 block (resident keys); out_ref: (TQ, 1) f32 per-row loss
    i = pl.program_id(0)
    row0 = pl.multiple_of(i * tq, tq)
    zq = z_ref[pl.ds(row0, tq), :]                                         # (TQ, Dp) bf16
    zk = z_ref[...]                                                        # (B2p, Dp) bf16
    b2p = zk.shape[0]

    logits = jax.lax.dot_general(zq, zk, (((1,), (1,)), ((), ())),
                                 preferred_element_type=jnp.float32) * inv_temp  # (TQ, B2p)

    rows = row0 + jax.lax.broadcasted_iota(jnp.int32, (tq, 1), 0)          # global row ids
    cols = jax.lax.broadcasted_iota(jnp.int32, (tq, b2p), 1)
    partner = rows ^ 1                                                     # (view0, view1) pairs
    row_real = rows < b2

    pos = jnp.sum(jnp.where(cols == partner, logits, 0.0), axis=1, keepdims=True)
    valid = (cols != rows) & (cols < b2) & row_real                        # off-diag real cols
    masked = jnp.where(valid, logits, -1e30)
    m = jnp.max(masked, axis=1, keepdims=True)
    lse = m + jnp.log(jnp.sum(jnp.exp(masked - m), axis=1, keepdims=True))

    # CE with label 0 per real row; padded rows zeroed BEFORE any reduction.
    out_ref[...] = jnp.where(row_real, lse - pos, 0.0)


# -------- plain-JAX glue --------
def im2col(x, k=3, stride=2, pad=1):
    """x: (B, C, H, W) -> patches (B, Ho*Wo, C*k*k) matching PyTorch conv weight flattening."""
    B, C, H, W = x.shape
    xp = jnp.pad(x, ((0, 0), (0, 0), (pad, pad), (pad, pad)))
    Ho = (H + 2 * pad - k) // stride + 1
    Wo = (W + 2 * pad - k) // stride + 1
    cols = []
    for ki in range(k):
        for kj in range(k):
            cols.append(xp[:, :, ki:ki + stride * Ho:stride, kj:kj + stride * Wo:stride])
    patches = jnp.stack(cols, axis=2)               # (B, C, k*k, Ho, Wo)
    patches = patches.transpose(0, 3, 4, 1, 2)      # (B, Ho, Wo, C, k*k)
    return patches.reshape(B, Ho * Wo, C * k * k), Ho * Wo


@jax.jit
def simclr_forward_train(img, conv_w, conv_b, w1, b1, w2, b2):
    N, V, C, H, W = img.shape
    assert V == 2
    B2 = N * V
    x = img.reshape(B2, C, H, W)                    # (N*2, C, H, W) — same reshape as PyTorch

    # --- im2col (glue) --- TODO(synk): fuse into the backbone kernel (9 shifted-slice matmuls)
    patches, S = im2col(x, k=3, stride=2, pad=1)    # (B2, S, C*9)
    P = patches.shape[-1]
    Cout, HID, D = conv_w.shape[0], w1.shape[1], w2.shape[1]

    # --- padding: lane-dense feature dims; batch rows to multiple of 16 (bf16 sublane pack) ---
    B2p = _round_up(B2, 16)
    Cp = _round_up(Cout, LANE)
    Hp = _round_up(HID, LANE)
    Dp = _round_up(D, LANE)

    # --- backbone tiling (contraction dim P kept at C*9 in HBM — not padded) ---
    TB = _pick_divisor_tile(B2p, cap=64)
    ts_cap = max(16, (BLOCK_BUDGET_BYTES // (TB * LANE * 2)) // 16 * 16)   # lane-padded bf16
    TS = min(_round_up(S, 16), ts_cap)
    S_pad = _round_up(S, TS)

    patches_p = jnp.pad(patches, ((0, B2p - B2), (0, S_pad - S), (0, 0))).astype(jnp.bfloat16)
    wmat_p = jnp.pad(conv_w.reshape(Cout, -1).T, ((0, 0), (0, Cp - Cout))).astype(jnp.bfloat16)
    convb_p = jnp.pad(conv_b, ((0, 0), (0, Cp - Cout))).astype(jnp.float32)
    w1p = jnp.pad(w1, ((0, Cp - Cout), (0, Hp - HID))).astype(jnp.bfloat16)
    b1p = jnp.pad(b1, ((0, 0), (0, Hp - HID))).astype(jnp.float32)
    w2p = jnp.pad(w2, ((0, Hp - HID), (0, Dp - D))).astype(jnp.bfloat16)
    b2p = jnp.pad(b2, ((0, 0), (0, Dp - D))).astype(jnp.float32)

    # --- kernel 1: backbone conv-matmul + ReLU + accumulated GAP ---
    feats = pl.pallas_call(
        partial(backbone_kernel, inv_s=1.0 / S, s_true=S, mask_spatial=(S_pad != S)),
        out_shape=jax.ShapeDtypeStruct((B2p, Cp), jnp.float32),
        grid_spec=pltpu.PrefetchScalarGridSpec(
            num_scalar_prefetch=0,
            grid=(B2p // TB, S_pad // TS),
            in_specs=[
                pl.BlockSpec((TB, TS, P), lambda i, j: (i, j, 0)),   # patches tile (K un-padded)
                pl.BlockSpec((P, Cp), lambda i, j: (0, 0)),          # conv weight (resident)
                pl.BlockSpec((1, Cp), lambda i, j: (0, 0)),          # conv bias (resident)
            ],
            out_specs=pl.BlockSpec((TB, Cp), lambda i, j: (i, 0)),   # accumulator-resident output
        ),
        compiler_params=pltpu.CompilerParams(
            dimension_semantics=("parallel", "arbitrary"),
            vmem_limit_bytes=VMEM_LIMIT_BYTES),
    )(patches_p, wmat_p, convb_p)

    # --- kernel 2: neck MLP + L2 normalize -> bf16 z ---
    TR = _pick_divisor_tile(B2p, cap=256)
    z = pl.pallas_call(
        neck_kernel,
        out_shape=jax.ShapeDtypeStruct((B2p, Dp), jnp.bfloat16),
        grid_spec=pltpu.PrefetchScalarGridSpec(
            num_scalar_prefetch=0,
            grid=(B2p // TR,),
            in_specs=[
                pl.BlockSpec((TR, Cp), lambda i: (i, 0)),
                pl.BlockSpec((Cp, Hp), lambda i: (0, 0)),
                pl.BlockSpec((1, Hp), lambda i: (0, 0)),
                pl.BlockSpec((Hp, Dp), lambda i: (0, 0)),
                pl.BlockSpec((1, Dp), lambda i: (0, 0)),
            ],
            out_specs=pl.BlockSpec((TR, Dp), lambda i: (i, 0)),
        ),
        compiler_params=pltpu.CompilerParams(
            dimension_semantics=("parallel",),
            vmem_limit_bytes=VMEM_LIMIT_BYTES),
    )(feats, w1p, b1p, w2p, b2p)

    # --- kernel 3: NT-Xent loss, row-tiled, masks generated in-kernel from iota ---
    TQ = _pick_divisor_tile(B2p, cap=128)
    per_row = pl.pallas_call(
        partial(loss_kernel, b2=B2, tq=TQ, inv_temp=1.0 / TEMPERATURE),
        out_shape=jax.ShapeDtypeStruct((B2p, 1), jnp.float32),
        grid_spec=pltpu.PrefetchScalarGridSpec(
            num_scalar_prefetch=0,
            grid=(B2p // TQ,),
            in_specs=[pl.BlockSpec((B2p, Dp), lambda i: (0, 0))],    # full z resident (keys)
            out_specs=pl.BlockSpec((TQ, 1), lambda i: (i, 0)),
        ),
        compiler_params=pltpu.CompilerParams(
            dimension_semantics=("parallel",),
            vmem_limit_bytes=VMEM_LIMIT_BYTES),
    )(z)

    return jnp.sum(per_row) / B2                     # mean CE over the 2N real rows


if __name__ == "__main__":
    key = jax.random.PRNGKey(0)
    k_img, k_conv, k_w1, k_w2 = jax.random.split(key, 4)

    # Small shapes consistent with forward_train: img (N, 2, C, H, W)
    N, V, C, H, W = 2, 2, 4, 16, 16
    C_out, HID, D = 32, 32, 16

    img = jax.random.normal(k_img, (N, V, C, H, W), dtype=jnp.float32)

    # Deterministic, kaiming-style synthetic parameters.
    conv_w = jax.random.normal(k_conv, (C_out, C, 3, 3), jnp.float32) * jnp.sqrt(2.0 / (C * 9))
    conv_b = jnp.zeros((1, C_out), jnp.float32)
    w1 = jax.random.normal(k_w1, (C_out, HID), jnp.float32) * jnp.sqrt(2.0 / C_out)
    b1 = jnp.zeros((1, HID), jnp.float32)
    w2 = jax.random.normal(k_w2, (HID, D), jnp.float32) * jnp.sqrt(2.0 / HID)
    b2 = jnp.zeros((1, D), jnp.float32)

    loss = simclr_forward_train(img, conv_w, conv_b, w1, b1, w2, b2)
    loss = jax.block_until_ready(loss)
    assert jnp.isfinite(loss), f"non-finite loss: {loss}"
    print("KERNEL_OK")
</pallas_src>

<mosaic_0001>
module attributes {stable_mosaic.version = 11 : i64} {
  func.func @backbone_kernel(%arg0: i32, %arg1: i32, %arg2: memref<16x64x36xbf16, #tpu.memory_space<vmem>>, %arg3: memref<36x128xbf16, #tpu.memory_space<vmem>>, %arg4: memref<1x128xf32, #tpu.memory_space<vmem>>, %arg5: memref<16x128xf32, #tpu.memory_space<vmem>>) attributes {dimension_semantics = [#tpu.dimension_semantics<parallel>, #tpu.dimension_semantics<arbitrary>], iteration_bounds = array<i64: 1, 1>, scalar_prefetch = 0 : i64, scratch_operands = 0 : i64, tpu.core_type = #tpu.core_type<tc>, window_params = [{transform_indices = @transform_0, window_bounds = array<i64: 16, 64, 36>}, {pipeline_mode = #tpu.pipeline_mode<synchronous>, transform_indices = @transform_1, window_bounds = array<i64: 36, 128>}, {pipeline_mode = #tpu.pipeline_mode<synchronous>, transform_indices = @transform_2, window_bounds = array<i64: 1, 128>}, {transform_indices = @transform_3, window_bounds = array<i64: 16, 128>}]} {
    %c0_i32 = arith.constant 0 : i32
    %0 = arith.cmpi eq, %arg1, %c0_i32 : i32
    %1 = arith.extui %0 : i1 to i32
    %c0_i32_0 = arith.constant 0 : i32
    %2 = arith.cmpi ne, %1, %c0_i32_0 : i32
    scf.if %2 {
      %cst_15 = arith.constant 0.000000e+00 : f32
      %20 = vector.broadcast %cst_15 : f32 to vector<16x128xf32>
      %c0_16 = arith.constant 0 : index
      %c0_17 = arith.constant 0 : index
      %21 = vector.load %arg5[%c0_16, %c0_17] : memref<16x128xf32, #tpu.memory_space<vmem>>, vector<16x128xf32>
      tpu.vector_store %arg5[%c0_16, %c0_17], %20 {strides = array<i32>} : memref<16x128xf32, #tpu.memory_space<vmem>>, vector<16x128xf32>,
    } else {
    }
    %c0 = arith.constant 0 : index
    %c0_1 = arith.constant 0 : index
    %c0_2 = arith.constant 0 : index
    %3 = vector.load %arg2[%c0, %c0_1, %c0_2] : memref<16x64x36xbf16, #tpu.memory_space<vmem>>, vector<16x64x36xbf16>
    %4 = vector.shape_cast %3 : vector<16x64x36xbf16> to vector<1024x36xbf16>
    %c0_3 = arith.constant 0 : index
    %c0_4 = arith.constant 0 : index
    %5 = vector.load %arg3[%c0_3, %c0_4] : memref<36x128xbf16, #tpu.memory_space<vmem>>, vector<36x128xbf16>
    %cst = arith.constant dense<0.000000e+00> : vector<1024x128xf32>
    %6 = tpu.matmul %4, %5, %cst {dimension_numbers = #tpu.dot_dimension_numbers<[1], [0], [0], [1], [0, 0, 1, 1], [], []>} : vector<1024x36xbf16>, vector<36x128xbf16>, vector<1024x128xf32> -> vector<1024x128xf32>
    %c0_5 = arith.constant 0 : index
    %c0_6 = arith.constant 0 : index
    %7 = vector.load %arg4[%c0_5, %c0_6] : memref<1x128xf32, #tpu.memory_space<vmem>>, vector<1x128xf32>
    %8 = vector.broadcast %7 : vector<1x128xf32> to vector<1024x128xf32>
    %9 = arith.addf %6, %8 : vector<1024x128xf32>
    %cst_7 = arith.constant 0.000000e+00 : f32
    %10 = vector.broadcast %cst_7 : f32 to vector<1024x128xf32>
    %11 = arith.maximumf %9, %10 : vector<1024x128xf32>
    %12 = vector.shape_cast %11 : vector<1024x128xf32> to vector<16x64x128xf32>
    %c0_8 = arith.constant 0 : index
    %c0_9 = arith.constant 0 : index
    %13 = vector.load %arg5[%c0_8, %c0_9] : memref<16x128xf32, #tpu.memory_space<vmem>>, vector<16x128xf32>
    %cst_10 = arith.constant dense<0.000000e+00> : vector<16x128xf32>
    %14 = vector.multi_reduction <add>, %12, %cst_10 [1] : vector<16x64x128xf32> to vector<16x128xf32>
    %15 = arith.addf %13, %14 : vector<16x128xf32>
    %c0_11 = arith.constant 0 : index
    %c0_12 = arith.constant 0 : index
    %16 = vector.load %arg5[%c0_11, %c0_12] : memref<16x128xf32, #tpu.memory_space<vmem>>, vector<16x128xf32>
    tpu.vector_store %arg5[%c0_11, %c0_12], %15 {strides = array<i32>} : memref<16x128xf32, #tpu.memory_space<vmem>>, vector<16x128xf32>,
    %c0_i32_13 = arith.constant 0 : i32
    %17 = arith.cmpi eq, %arg1, %c0_i32_13 : i32
    %18 = arith.extui %17 : i1 to i32
    %c0_i32_14 = arith.constant 0 : i32
    %19 = arith.cmpi ne, %18, %c0_i32_14 : i32
    scf.if %19 {
      %c0_15 = arith.constant 0 : index
      %c0_16 = arith.constant 0 : index
      %20 = vector.load %arg5[%c0_15, %c0_16] : memref<16x128xf32, #tpu.memory_space<vmem>>, vector<16x128xf32>
      %cst_17 = arith.constant 1.562500e-02 : f32
      %21 = vector.broadcast %cst_17 : f32 to vector<16x128xf32>
      %22 = arith.mulf %20, %21 : vector<16x128xf32>
      %c0_18 = arith.constant 0 : index
      %c0_19 = arith.constant 0 : index
      %23 = vector.load %arg5[%c0_18, %c0_19] : memref<16x128xf32, #tpu.memory_space<vmem>>, vector<16x128xf32>
      tpu.vector_store %arg5[%c0_18, %c0_19], %22 {strides = array<i32>} : memref<16x128xf32, #tpu.memory_space<vmem>>, vector<16x128xf32>,
    } else {
    }
    return
  }
  func.func @transform_0(%arg0: i32, %arg1: i32) -> (i32, i32, i32) {
    %c0_i32 = arith.constant 0 : i32
    %c0_i32_0 = arith.constant 0 : i32
    return %arg0, %arg1, %c0_i32 : i32, i32, i32
  }
  func.func @transform_1(%arg0: i32, %arg1: i32) -> (i32, i32) {
    %c0_i32 = arith.constant 0 : i32
    %c0_i32_0 = arith.constant 0 : i32
    %c0_i32_1 = arith.constant 0 : i32
    return %c0_i32, %c0_i32_0 : i32, i32
  }
  func.func @transform_2(%arg0: i32, %arg1: i32) -> (i32, i32) {
    %c0_i32 = arith.constant 0 : i32
    %c0_i32_0 = arith.constant 0 : i32
    %c0_i32_1 = arith.constant 0 : i32
    return %c0_i32, %c0_i32_0 : i32, i32
  }
  func.func @transform_3(%arg0: i32, %arg1: i32) -> (i32, i32) {
    %c0_i32 = arith.constant 0 : i32
    %c0_i32_0 = arith.constant 0 : i32
    return %arg0, %c0_i32 : i32, i32
  }
}

module attributes {stable_mosaic.version = 11 : i64} {
  func.func @neck_kernel(%arg0: i32, %arg1: memref<16x128xf32, #tpu.memory_space<vmem>>, %arg2: memref<128x128xbf16, #tpu.memory_space<vmem>>, %arg3: memref<1x128xf32, #tpu.memory_space<vmem>>, %arg4: memref<128x128xbf16, #tpu.memory_space<vmem>>, %arg5: memref<1x128xf32, #tpu.memory_space<vmem>>, %arg6: memref<16x128xbf16, #tpu.memory_space<vmem>>) attributes {dimension_semantics = [#tpu.dimension_semantics<parallel>], iteration_bounds = array<i64: 1>, scalar_prefetch = 0 : i64, scratch_operands = 0 : i64, tpu.core_type = #tpu.core_type<tc>, window_params = [{transform_indices = @transform_0, window_bounds = array<i64: 16, 128>}, {pipeline_mode = #tpu.pipeline_mode<synchronous>, transform_indices = @transform_1, window_bounds = array<i64: 128, 128>}, {pipeline_mode = #tpu.pipeline_mode<synchronous>, transform_indices = @transform_2, window_bounds = array<i64: 1, 128>}, {pipeline_mode = #tpu.pipeline_mode<synchronous>, transform_indices = @transform_3, window_bounds = array<i64: 128, 128>}, {pipeline_mode = #tpu.pipeline_mode<synchronous>, transform_indices = @transform_4, window_bounds = array<i64: 1, 128>}, {transform_indices = @transform_5, window_bounds = array<i64: 16, 128>}]} {
    %c0 = arith.constant 0 : index
    %c0_0 = arith.constant 0 : index
    %0 = vector.load %arg1[%c0, %c0_0] : memref<16x128xf32, #tpu.memory_space<vmem>>, vector<16x128xf32>
    %1 = arith.truncf %0 : vector<16x128xf32> to vector<16x128xbf16>
    %c0_1 = arith.constant 0 : index
    %c0_2 = arith.constant 0 : index
    %2 = vector.load %arg2[%c0_1, %c0_2] : memref<128x128xbf16, #tpu.memory_space<vmem>>, vector<128x128xbf16>
    %cst = arith.constant dense<0.000000e+00> : vector<16x128xf32>
    %3 = tpu.matmul %1, %2, %cst {dimension_numbers = #tpu.dot_dimension_numbers<[1], [0], [0], [1], [0, 0, 1, 1], [], []>} : vector<16x128xbf16>, vector<128x128xbf16>, vector<16x128xf32> -> vector<16x128xf32>
    %c0_3 = arith.constant 0 : index
    %c0_4 = arith.constant 0 : index
    %4 = vector.load %arg3[%c0_3, %c0_4] : memref<1x128xf32, #tpu.memory_space<vmem>>, vector<1x128xf32>
    %5 = vector.broadcast %4 : vector<1x128xf32> to vector<16x128xf32>
    %6 = arith.addf %3, %5 : vector<16x128xf32>
    %cst_5 = arith.constant 0.000000e+00 : f32
    %7 = vector.broadcast %cst_5 : f32 to vector<16x128xf32>
    %8 = arith.maximumf %6, %7 : vector<16x128xf32>
    %9 = arith.truncf %8 : vector<16x128xf32> to vector<16x128xbf16>
    %c0_6 = arith.constant 0 : index
    %c0_7 = arith.constant 0 : index
    %10 = vector.load %arg4[%c0_6, %c0_7] : memref<128x128xbf16, #tpu.memory_space<vmem>>, vector<128x128xbf16>
    %cst_8 = arith.constant dense<0.000000e+00> : vector<16x128xf32>
    %11 = tpu.matmul %9, %10, %cst_8 {dimension_numbers = #tpu.dot_dimension_numbers<[1], [0], [0], [1], [0, 0, 1, 1], [], []>} : vector<16x128xbf16>, vector<128x128xbf16>, vector<16x128xf32> -> vector<16x128xf32>
    %c0_9 = arith.constant 0 : index
    %c0_10 = arith.constant 0 : index
    %12 = vector.load %arg5[%c0_9, %c0_10] : memref<1x128xf32, #tpu.memory_space<vmem>>, vector<1x128xf32>
    %13 = vector.broadcast %12 : vector<1x128xf32> to vector<16x128xf32>
    %14 = arith.addf %11, %13 : vector<16x128xf32>
    %15 = arith.mulf %14, %14 : vector<16x128xf32>
    %cst_11 = arith.constant dense<0.000000e+00> : vector<16xf32>
    %16 = vector.multi_reduction <add>, %15, %cst_11 [1] : vector<16x128xf32> to vector<16xf32>
    %17 = vector.shape_cast %16 : vector<16xf32> to vector<16x1xf32>
    %18 = math.sqrt %17 : vector<16x1xf32>
    %cst_12 = arith.constant 1.000000e-10 : f32
    %19 = vector.broadcast %cst_12 : f32 to vector<16x1xf32>
    %20 = arith.addf %18, %19 : vector<16x1xf32>
    %21 = tpu.reciprocal %20 {approx = true} : vector<16x1xf32> -> vector<16x1xf32>
    %22 = vector.broadcast %21 : vector<16x1xf32> to vector<16x128xf32>
    %23 = arith.mulf %14, %22 : vector<16x128xf32>
    %24 = arith.truncf %23 : vector<16x128xf32> to vector<16x128xbf16>
    %c0_13 = arith.constant 0 : index
    %c0_14 = arith.constant 0 : index
    %25 = vector.load %arg6[%c0_13, %c0_14] : memref<16x128xbf16, #tpu.memory_space<vmem>>, vector<16x128xbf16>
    tpu.vector_store %arg6[%c0_13, %c0_14], %24 {strides = array<i32>} : memref<16x128xbf16, #tpu.memory_space<vmem>>, vector<16x128xbf16>,
    return
  }
  func.func @transform_0(%arg0: i32) -> (i32, i32) {
    %c0_i32 = arith.constant 0 : i32
    %c0_i32_0 = arith.constant 0 : i32
    return %arg0, %c0_i32 : i32, i32
  }
  func.func @transform_1(%arg0: i32) -> (i32, i32) {
    %c0_i32 = arith.constant 0 : i32
    %c0_i32_0 = arith.constant 0 : i32
    %c0_i32_1 = arith.constant 0 : i32
    return %c0_i32, %c0_i32_0 : i32, i32
  }
  func.func @transform_2(%arg0: i32) -> (i32, i32) {
    %c0_i32 = arith.constant 0 : i32
    %c0_i32_0 = arith.constant 0 : i32
    %c0_i32_1 = arith.constant 0 : i32
    return %c0_i32, %c0_i32_0 : i32, i32
  }
  func.func @transform_3(%arg0: i32) -> (i32, i32) {
    %c0_i32 = arith.constant 0 : i32
    %c0_i32_0 = arith.constant 0 : i32
    %c0_i32_1 = arith.constant 0 : i32
    return %c0_i32, %c0_i32_0 : i32, i32
  }
  func.func @transform_4(%arg0: i32) -> (i32, i32) {
    %c0_i32 = arith.constant 0 : i32
    %c0_i32_0 = arith.constant 0 : i32
    %c0_i32_1 = arith.constant 0 : i32
    return %c0_i32, %c0_i32_0 : i32, i32
  }
  func.func @transform_5(%arg0: i32) -> (i32, i32) {
    %c0_i32 = arith.constant 0 : i32
    %c0_i32_0 = arith.constant 0 : i32
    return %arg0, %c0_i32 : i32, i32
  }
}

module attributes {stable_mosaic.version = 11 : i64} {
  func.func @loss_kernel(%arg0: i32, %arg1: memref<16x128xbf16, #tpu.memory_space<vmem>>, %arg2: memref<16x1xf32, #tpu.memory_space<vmem>>) attributes {dimension_semantics = [#tpu.dimension_semantics<parallel>], iteration_bounds = array<i64: 1>, scalar_prefetch = 0 : i64, scratch_operands = 0 : i64, tpu.core_type = #tpu.core_type<tc>, window_params = [{pipeline_mode = #tpu.pipeline_mode<synchronous>, transform_indices = @transform_0, window_bounds = array<i64: 16, 128>}, {transform_indices = @transform_1, window_bounds = array<i64: 16, 1>}]} {
    %c16_i32 = arith.constant 16 : i32
    %0 = arith.muli %arg0, %c16_i32 : i32
    %1 = tpu.assume_multiple %0, 16 : i32
    %2 = arith.index_cast %1 : i32 to index
    %c0 = arith.constant 0 : index
    %3 = vector.load %arg1[%2, %c0] : memref<16x128xbf16, #tpu.memory_space<vmem>>, vector<16x128xbf16>
    %c0_0 = arith.constant 0 : index
    %c0_1 = arith.constant 0 : index
    %4 = vector.load %arg1[%c0_0, %c0_1] : memref<16x128xbf16, #tpu.memory_space<vmem>>, vector<16x128xbf16>
    %cst = arith.constant dense<0.000000e+00> : vector<16x16xf32>
    %5 = tpu.matmul %3, %4, %cst {dimension_numbers = #tpu.dot_dimension_numbers<[1], [1], [0], [0], [0, 0, 1, 0], [], []>} : vector<16x128xbf16>, vector<16x128xbf16>, vector<16x16xf32> -> vector<16x16xf32>
    %cst_2 = arith.constant 1.000000e+01 : f32
    %6 = vector.broadcast %cst_2 : f32 to vector<16x16xf32>
    %7 = arith.mulf %5, %6 : vector<16x16xf32>
    %8 = tpu.iota {dimensions = array<i32: 0>} : vector<16x1xi32>
    %9 = vector.broadcast %1 : i32 to vector<16x1xi32>
    %10 = arith.addi %9, %8 : vector<16x1xi32>
    %11 = tpu.iota {dimensions = array<i32: 1>} : vector<16x16xi32>
    %c1_i32 = arith.constant 1 : i32
    %12 = vector.broadcast %c1_i32 : i32 to vector<16x1xi32>
    %13 = arith.xori %10, %12 : vector<16x1xi32>
    %c4_i32 = arith.constant 4 : i32
    %14 = vector.broadcast %c4_i32 : i32 to vector<16x1xi32>
    %15 = arith.cmpi slt, %10, %14 : vector<16x1xi32>
    %16 = vector.broadcast %13 : vector<16x1xi32> to vector<16x16xi32>
    %17 = arith.cmpi eq, %11, %16 : vector<16x16xi32>
    %cst_3 = arith.constant 0.000000e+00 : f32
    %18 = vector.broadcast %cst_3 : f32 to vector<16x16xf32>
    %19 = arith.select %17, %7, %18 : vector<16x16xi1>, vector<16x16xf32>
    %cst_4 = arith.constant dense<0.000000e+00> : vector<16xf32>
    %20 = vector.multi_reduction <add>, %19, %cst_4 [1] : vector<16x16xf32> to vector<16xf32>
    %21 = vector.shape_cast %20 : vector<16xf32> to vector<16x1xf32>
    %22 = vector.broadcast %10 : vector<16x1xi32> to vector<16x16xi32>
    %23 = arith.cmpi ne, %11, %22 : vector<16x16xi32>
    %c4_i32_5 = arith.constant 4 : i32
    %24 = vector.broadcast %c4_i32_5 : i32 to vector<16x16xi32>
    %25 = arith.cmpi slt, %11, %24 : vector<16x16xi32>
    %26 = arith.andi %23, %25 : vector<16x16xi1>
    %27 = vector.broadcast %15 : vector<16x1xi1> to vector<16x16xi1>
    %28 = arith.andi %26, %27 : vector<16x16xi1>
    %cst_6 = arith.constant -1.000000e+30 : f32
    %29 = vector.broadcast %cst_6 : f32 to vector<16x16xf32>
    %30 = arith.select %28, %7, %29 : vector<16x16xi1>, vector<16x16xf32>
    %cst_7 = arith.constant dense<0xFF800000> : vector<16xf32>
    %31 = vector.multi_reduction <maximumf>, %30, %cst_7 [1] : vector<16x16xf32> to vector<16xf32>
    %32 = vector.shape_cast %31 : vector<16xf32> to vector<16x1xf32>
    %33 = vector.broadcast %32 : vector<16x1xf32> to vector<16x16xf32>
    %34 = arith.subf %30, %33 : vector<16x16xf32>
    %35 = math.exp %34 : vector<16x16xf32>
    %cst_8 = arith.constant dense<0.000000e+00> : vector<16xf32>
    %36 = vector.multi_reduction <add>, %35, %cst_8 [1] : vector<16x16xf32> to vector<16xf32>
    %37 = vector.shape_cast %36 : vector<16xf32> to vector<16x1xf32>
    %38 = math.log %37 : vector<16x1xf32>
    %39 = arith.addf %32, %38 : vector<16x1xf32>
    %40 = arith.subf %39, %21 : vector<16x1xf32>
    %cst_9 = arith.constant 0.000000e+00 : f32
    %41 = vector.broadcast %cst_9 : f32 to vector<16x1xf32>
    %42 = arith.select %15, %40, %41 : vector<16x1xi1>, vector<16x1xf32>
    %c0_10 = arith.constant 0 : index
    %c0_11 = arith.constant 0 : index
    %43 = vector.load %arg2[%c0_10, %c0_11] : memref<16x1xf32, #tpu.memory_space<vmem>>, vector<16x1xf32>
    tpu.vector_store %arg2[%c0_10, %c0_11], %42 {strides = array<i32>} : memref<16x1xf32, #tpu.memory_space<vmem>>, vector<16x1xf32>,
    return
  }
  func.func @transform_0(%arg0: i32) -> (i32, i32) {
    %c0_i32 = arith.constant 0 : i32
    %c0_i32_0 = arith.constant 0 : i32
    %c0_i32_1 = arith.constant 0 : i32
    return %c0_i32, %c0_i32_0 : i32, i32
  }
  func.func @transform_1(%arg0: i32) -> (i32, i32) {
    %c0_i32 = arith.constant 0 : i32
    %c0_i32_0 = arith.constant 0 : i32
    return %arg0, %c0_i32 : i32, i32
  }
}

</mosaic_0001>

<llo_original>
// kernel: simclr_forward_train.4
$region0: #{simclr_forward_train.4}
  #allocation0 [shape = 'u32[]', space=smem, size = 0x4, offset = 0x4, fixed_abs, tag = 'smem constant byte address 0x4 - core index']
  #allocation1 [shape = 'u32[72,128]{1,0:T(1,128)}', space=vmem, size = 0x9000, scoped, tag = 'internal scratch']
  %s0 = inlined_call_operand.vmem [shape: f32[16,128], index: 0, kind: input, shape index: {}]
  %s1 = inlined_call_operand.vmem [shape: bf16[128,128], index: 1, kind: input, shape index: {}]
  %s2 = inlined_call_operand.vmem [shape: f32[1,128], index: 2, kind: input, shape index: {}]
  %s3 = inlined_call_operand.vmem [shape: bf16[128,128], index: 3, kind: input, shape index: {}]
  %s4 = inlined_call_operand.vmem [shape: f32[1,128], index: 4, kind: input, shape index: {}]
  %s5 = inlined_call_operand.vmem [shape: bf16[16,128], index: 5, kind: output, shape index: {}]
  %s6 = sld [smem:[#allocation0]]
  $region30: #{simclr_forward_train.4} parent=0
    _
  %s8 = ssub.s32 1, %s6
  %s9 = scalar_select 0, %s8, %s6
  // Predicated region
  $region2: #{simclr_forward_train.4} parent=0 // pred_check
    _
  $region3: #{simclr_forward_train.4} parent=0 // pred_check_branch
    %11 = sbr.rel (0) target = $region5
  $region4: #{simclr_forward_train.4} parent=0 // pred_region
    _
  $region5: #{simclr_forward_train.4} parent=0 // pred_fallthru
    _
  // Predicated region
  $region6: #{simclr_forward_train.4} parent=0 // pred_check
    _
  $region7: #{simclr_forward_train.4} parent=0 // pred_check_branch
    %13 = sbr.rel (0) target = $region9
  $region8: #{simclr_forward_train.4} parent=0 // pred_region
    _
  $region9: #{simclr_forward_train.4} parent=0 // pred_fallthru
    _
  // Predicated region
  $region10: #{simclr_forward_train.4} parent=0 // pred_check
    _
  $region11: #{simclr_forward_train.4} parent=0 // pred_check_branch
    %15 = sbr.rel (0) target = $region13
  $region12: #{simclr_forward_train.4} parent=0 // pred_region
    _
  $region13: #{simclr_forward_train.4} parent=0 // pred_fallthru
    _
  // Predicated region
  $region14: #{simclr_forward_train.4} parent=0 // pred_check
    _
  $region15: #{simclr_forward_train.4} parent=0 // pred_check_branch
    %17 = sbr.rel (0) target = $region17
  $region16: #{simclr_forward_train.4} parent=0 // pred_region
    _
  $region17: #{simclr_forward_train.4} parent=0 // pred_fallthru
    _
  // Predicated region
  $region18: #{simclr_forward_train.4} parent=0 // pred_check
    _
  $region19: #{simclr_forward_train.4} parent=0 // pred_check_branch
    %19 = sbr.rel (0) target = $region21
  $region20: #{simclr_forward_train.4} parent=0 // pred_region
    _
  $region21: #{simclr_forward_train.4} parent=0 // pred_fallthru
    _
  %v20 = vld [vmem:[%s0] sm:$0xff]
  %v21 = vld [vmem:[%s0 + $0x8] sm:$0xff]
  %v22 = vpack.c.bf16 %v21, %v20
  %v23 = vld [vmem:[%s1] sm:$0xf]
  %v24 = vld [vmem:[%s1 + $0x4] sm:$0xf]
  %v25 = vld [vmem:[%s1 + $0x8] sm:$0xf]
  %v26 = vld [vmem:[%s1 + $0xc] sm:$0xf]
  %v27 = vld [vmem:[%s1 + $0x10] sm:$0xf]
  %v28 = vld [vmem:[%s1 + $0x14] sm:$0xf]
  %v29 = vld [vmem:[%s1 + $0x18] sm:$0xf]
  %v30 = vld [vmem:[%s1 + $0x1c] sm:$0xf]
  %v31 = vld [vmem:[%s1 + $0x20] sm:$0xf]
  %v32 = vld [vmem:[%s1 + $0x24] sm:$0xf]
  %v33 = vld [vmem:[%s1 + $0x28] sm:$0xf]
  %v34 = vld [vmem:[%s1 + $0x2c] sm:$0xf]
  %v35 = vld [vmem:[%s1 + $0x30] sm:$0xf]
  %v36 = vld [vmem:[%s1 + $0x34] sm:$0xf]
  %v37 = vld [vmem:[%s1 + $0x38] sm:$0xf]
  %v38 = vld [vmem:[%s1 + $0x3c] sm:$0xf]
  %v39 = vld [vmem:[%s2] sm:$0x1]
  %v41 = vperm.slane %v39, 0
  %v59 = vunpack.c.l.b16 %v23
  %v60 = vunpack.c.l.b16 %v24
  %v61 = vunpack.c.l.b16 %v25
  %v62 = vunpack.c.l.b16 %v26
  %v63 = vunpack.c.l.b16 %v27
  %v64 = vunpack.c.l.b16 %v28
  %v65 = vunpack.c.l.b16 %v29
  %v66 = vunpack.c.l.b16 %v30
  %v67 = vunpack.c.l.b16 %v31
  %v68 = vunpack.c.l.b16 %v32
  %v69 = vunpack.c.l.b16 %v33
  %v70 = vunpack.c.l.b16 %v34
  %v71 = vunpack.c.l.b16 %v35
  %v72 = vunpack.c.l.b16 %v36
  %v73 = vunpack.c.l.b16 %v37
  %v74 = vunpack.c.l.b16 %v38
  %v75 = vpack.c.b16 %v60, %v59
  %v76 = vpack.c.b16 %v62, %v61
  %v77 = vpack.c.b16 %v64, %v63
  %v78 = vpack.c.b16 %v66, %v65
  %v79 = vpack.c.b16 %v68, %v67
  %v80 = vpack.c.b16 %v70, %v69
  %v81 = vpack.c.b16 %v72, %v71
  %v82 = vpack.c.b16 %v74, %v73
  %91 = vmatpush.bf16.msra.mxu0 %v82
  %92 = vmatpush.bf16.msra.mxu0 %v81
  %93 = vmatpush.bf16.msra.mxu0 %v80
  %94 = vmatpush.bf16.msra.mxu0 %v79
  %95 = vmatpush.bf16.msra.mxu0 %v78
  %96 = vmatpush.bf16.msra.mxu0 %v77
  %97 = vmatpush.bf16.msra.mxu0 %v76
  %98 = vmatpush.bf16.msra.mxu0 %v75
  %99 = vmatmul.bf16.gmra.mxu0 %v22
  %v100 = vpop.f32.mrf.mxu0
  %v101 = vadd.f32 %v41, %v100
  %v102 = vpop.f32.mrf.mxu0
  %v103 = vadd.f32 %v41, %v102
  %104 = vdwg.mxu0
  %v105 = vmax.f32 %v101, 0.0
  %v106 = vmax.f32 %v103, 0.0
  %v107 = vpack.c.bf16 %v106, %v105
  %v108 = vld [vmem:[%s3] sm:$0xf]
  %v109 = vld [vmem:[%s3 + $0x4] sm:$0xf]
  %v110 = vld [vmem:[%s3 + $0x8] sm:$0xf]
  %v111 = vld [vmem:[%s3 + $0xc] sm:$0xf]
  %v112 = vld [vmem:[%s3 + $0x10] sm:$0xf]
  %v113 = vld [vmem:[%s3 + $0x14] sm:$0xf]
  %v114 = vld [vmem:[%s3 + $0x18] sm:$0xf]
  %v115 = vld [vmem:[%s3 + $0x1c] sm:$0xf]
  %v116 = vld [vmem:[%s3 + $0x20] sm:$0xf]
  %v117 = vld [vmem:[%s3 + $0x24] sm:$0xf]
  %v118 = vld [vmem:[%s3 + $0x28] sm:$0xf]
  %v119 = vld [vmem:[%s3 + $0x2c] sm:$0xf]
  %v120 = vld [vmem:[%s3 + $0x30] sm:$0xf]
  %v121 = vld [vmem:[%s3 + $0x34] sm:$0xf]
  %v122 = vld [vmem:[%s3 + $0x38] sm:$0xf]
  %v123 = vld [vmem:[%s3 + $0x3c] sm:$0xf]
  %v124 = vld [vmem:[%s4] sm:$0x1]
  %v126 = vperm.slane %v124, 0
  %v144 = vunpack.c.l.b16 %v108
  %v145 = vunpack.c.l.b16 %v109
  %v146 = vunpack.c.l.b16 %v110
  %v147 = vunpack.c.l.b16 %v111
  %v148 = vunpack.c.l.b16 %v112
  %v149 = vunpack.c.l.b16 %v113
  %v150 = vunpack.c.l.b16 %v114
  %v151 = vunpack.c.l.b16 %v115
  %v152 = vunpack.c.l.b16 %v116
  %v153 = vunpack.c.l.b16 %v117
  %v154 = vunpack.c.l.b16 %v118
  %v155 = vunpack.c.l.b16 %v119
  %v156 = vunpack.c.l.b16 %v120
  %v157 = vunpack.c.l.b16 %v121
  %v158 = vunpack.c.l.b16 %v122
  %v159 = vunpack.c.l.b16 %v123
  %v160 = vpack.c.b16 %v145, %v144
  %v161 = vpack.c.b16 %v147, %v146
  %v162 = vpack.c.b16 %v149, %v148
  %v163 = vpack.c.b16 %v151, %v150
  %v164 = vpack.c.b16 %v153, %v152
  %v165 = vpack.c.b16 %v155, %v154
  %v166 = vpack.c.b16 %v157, %v156
  %v167 = vpack.c.b16 %v159, %v158
  %176 = vmatpush.bf16.msra.mxu0 %v167
  %177 = vmatpush.bf16.msra.mxu0 %v166
  %178 = vmatpush.bf16.msra.mxu0 %v165
  %179 = vmatpush.bf16.msra.mxu0 %v164
  %180 = vmatpush.bf16.msra.mxu0 %v163
  %181 = vmatpush.bf16.msra.mxu0 %v162
  %182 = vmatpush.bf16.msra.mxu0 %v161
  %183 = vmatpush.bf16.msra.mxu0 %v160
  %184 = vmatmul.bf16.gmra.mxu0 %v107
  %v185 = vpop.f32.mrf.mxu0
  %v186 = vadd.f32 %v126, %v185
  %v187 = vpop.f32.mrf.mxu0
  %v188 = vadd.f32 %v126, %v187
  %189 = vdwg.mxu0
  %v190 = vmul.f32 %v186, %v186
  %v191 = vmul.f32 %v188, %v188
  %192 = vadd.xlane.f32.xlu0 %v190
  %v193 = vpop.xlane.xlu0 %192
  %194 = vadd.xlane.f32.xlu0 %v191
  %v195 = vpop.xlane.xlu0 %194
  %v196 = vrsqrt.pop %v193
  %v197 = vmul.f32 %v196, %v193
  %v198 = vmul.f32 %v197, %v196
  %v199 = vmul.f32 0.5, %v198
  %v200 = vsub.f32 1.5, %v199
  %v201 = vmul.f32 %v196, %v200
  %v202 = vmul.f32 %v193, %v201
  %vm203 = vcmp.eq.f32.partialorder %v193, inf
  %v204 = vsel %vm203, %v193, %v202
  %vm205 = vcmp.eq.f32.partialorder %v193, 0.0
  %v206 = vand.u32 %v193, 2147483648
  %v207 = vsel %vm205, %v206, %v204
  %v208 = vrsqrt.pop %v195
  %v209 = vmul.f32 %v208, %v195
  %v210 = vmul.f32 %v209, %v208
  %v211 = vmul.f32 0.5, %v210
  %v212 = vsub.f32 1.5, %v211
  %v213 = vmul.f32 %v208, %v212
  %v214 = vmul.f32 %v195, %v213
  %vm215 = vcmp.eq.f32.partialorder %v195, inf
  %v216 = vsel %vm215, %v195, %v214
  %vm217 = vcmp.eq.f32.partialorder %v195, 0.0
  %v218 = vand.u32 %v195, 2147483648
  %v219 = vsel %vm217, %v218, %v216
  %v220 = vadd.f32 %v207, 1e-10
  %v221 = vadd.f32 %v219, 1e-10
  %v222 = vrcp.pop %v220
  %v223 = vrcp.pop %v221
  %v224 = vmul.f32 %v186, %v222
  %v225 = vmul.f32 %v188, %v223
  %v226 = vpack.c.bf16 %v224, %v224
  %v227 = vpack.c.bf16 %v225, %v225
  %228 = vst [vmem:[%s5] sm:$0xf] %v226
  %229 = vst [vmem:[%s5 + $0x4] sm:$0xf] %v227
  // Predicated region
  $region22: #{simclr_forward_train.4} parent=0 // pred_check
    _
  $region23: #{simclr_forward_train.4} parent=0 // pred_check_branch
    %231 = sbr.rel (0) target = $region25
  $region24: #{simclr_forward_train.4} parent=0 // pred_region
    _
  $region25: #{simclr_forward_train.4} parent=0 // pred_fallthru
    _
  // Predicated region
  $region26: #{simclr_forward_train.4} parent=0 // pred_check
    _
  $region27: #{simclr_forward_train.4} parent=0 // pred_check_branch
    %233 = sbr.rel (0) target = $region29
  $region28: #{simclr_forward_train.4} parent=0 // pred_region
    _
  $region29: #{simclr_forward_train.4} parent=0 // pred_fallthru
    _

// kernel: simclr_forward_train.5
$region0: #{simclr_forward_train.5}
  #allocation0 [shape = 'u32[]', space=smem, size = 0x4, offset = 0x4, fixed_abs, tag = 'smem constant byte address 0x4 - core index']
  #allocation1 [shape = 'u32[72,128]{1,0:T(1,128)}', space=vmem, size = 0x9000, scoped, tag = 'internal scratch']
  %s0 = inlined_call_operand.vmem [shape: bf16[16,128], index: 0, kind: input, shape index: {}]
  %s1 = inlined_call_operand.vmem [shape: f32[16,1], index: 1, kind: output, shape index: {}]
  %s2 = sld [smem:[#allocation0]]
  $region14: #{simclr_forward_train.5} parent=0
    _
  %s4 = ssub.s32 1, %s2
  %s5 = scalar_select 0, %s4, %s2
  // Predicated region
  $region2: #{simclr_forward_train.5} parent=0 // pred_check
    _
  $region3: #{simclr_forward_train.5} parent=0 // pred_check_branch
    %7 = sbr.rel (0) target = $region5
  $region4: #{simclr_forward_train.5} parent=0 // pred_region
    _
  $region5: #{simclr_forward_train.5} parent=0 // pred_fallthru
    _
  %s9 = smul.u32 0, 16
  %s10 = sshra.s32 %s9, 3
  %s11 = sand.u32 %s9, 7
  %s12 = smul.addr %s10, 4
  %s13 = scalar_lea.vmem %s0, %s12
  %v14 = vld [vmem:[%s13] sm:$0xf]
  %v15 = vld [vmem:[%s13 + $0x4] sm:$0xf]
  %v16 = vld [vmem:[%s0] sm:$0xf]
  %v17 = vld [vmem:[%s0 + $0x4] sm:$0xf]
  %v20 = vunpack.c.l.b16 %v14
  %v21 = vunpack.c.l.b16 %v15
  %v22 = vpack.c.b16 %v21, %v20
  %v26 = vunpack.c.l.b16 %v16
  %v27 = vunpack.c.l.b16 %v17
  %v28 = vpack.c.b16 %v27, %v26
  %30 = vmatpush.bf16.xpose.msra.mxu0 0
  %31 = vmatpush.bf16.xpose.msra.mxu0 0
  %32 = vmatpush.bf16.xpose.msra.mxu0 0
  %33 = vmatpush.bf16.xpose.msra.mxu0 0
  %34 = vmatpush.bf16.xpose.msra.mxu0 0
  %35 = vmatpush.bf16.xpose.msra.mxu0 0
  %36 = vmatpush.bf16.xpose.msra.mxu0 0
  %37 = vmatpush.bf16.xpose.msra.mxu0 %v28
  %38 = vmatmul.bf16.gmra.mxu0 %v22
  %v39 = vpop.f32.mrf.mxu0
  %v40 = vadd.f32 0.0, %v39
  %v41 = vpop.f32.mrf.mxu0
  %v42 = vadd.f32 0.0, %v41
  %43 = vdwg.mxu0
  %v44 = vmul.f32 %v40, 10.0
  %v45 = vmul.f32 %v42, 10.0
  %v46 = vlaneseq
  %v47 = vshrl.u32 %v46, 7
  %v48 = vadd.s32 %v47, 8
  %v49 = vstv %s9
  %v50 = vadd.s32 %v49, %v47
  %v51 = vadd.s32 %v49, %v48
  %v52 = vlaneseq
  %v53 = vand.u32 %v52, 127
  %v54 = vxor.u32 %v50, 1
  %v55 = vxor.u32 %v51, 1
  %vm56 = vcmp.lt.s32.totalorder %v50, 4
  %vm57 = vcmp.lt.s32.totalorder %v51, 4
  %vm58 = vcmp.eq.s32.totalorder %v53, %v54
  %vm59 = vcmp.eq.s32.totalorder %v53, %v55
  %v60 = vsel %vm58, %v44, 0.0
  %v61 = vsel %vm59, %v45, 0.0
  %vm62 = vcmask 130048
  %v63 = vsel %vm62, %v60, 0.0
  %64 = vadd.xlane.f32.xlu0 %v63
  %v65 = vpop.xlane.xlu0 %64
  %v66 = vsel %vm62, %v61, 0.0
  %67 = vadd.xlane.f32.xlu0 %v66
  %v68 = vpop.xlane.xlu0 %67
  %vm69 = vcmp.ne.s32.totalorder %v53, %v50
  %vm70 = vcmp.ne.s32.totalorder %v53, %v51
  %vm71 = vcmp.lt.s32.totalorder %v53, 4
  %vm72 = vmand %vm69, %vm71
  %vm73 = vmand %vm70, %vm71
  %v74 = vsel %vm56, 1, 0
  %v75 = vsel %vm57, 1, 0
  %vm76 = vcmp.eq.s32.totalorder %v74, 1
  %vm77 = vcmp.eq.s32.totalorder %v75, 1
  %vm78 = vmand %vm72, %vm76
  %vm79 = vmand %vm73, %vm77
  %v80 = vsel %vm78, %v44, -1e+30
  %v81 = vsel %vm79, %v45, -1e+30
  %v82 = vsel %vm62, %v80, -inf
  %83 = vmax.xlane.f32.xlu0 %v82
  %v84 = vpop.xlane.xlu0 %83
  %v85 = vsel %vm62, %v81, -inf
  %86 = vmax.xlane.f32.xlu0 %v85
  %v87 = vpop.xlane.xlu0 %86
  %v88 = vsub.f32 %v80, %v84
  %v89 = vsub.f32 %v81, %v87
  %v90 = vmul.f32 %v88, 1.442695
  %v91 = vpow.pop %v90
  %v92 = vmul.f32 %v89, 1.442695
  %v93 = vpow.pop %v92
  %v94 = vsel %vm62, %v91, 0.0
  %95 = vadd.xlane.f32.xlu0 %v94
  %v96 = vpop.xlane.xlu0 %95
  %v97 = vsel %vm62, %v93, 0.0
  %98 = vadd.xlane.f32.xlu0 %v97
  %v99 = vpop.xlane.xlu0 %98
  %v100 = vlog2.pop %v96
  %v101 = vmul.f32 %v100, 0.6931472
  %v102 = vlog2.pop %v99
  %v103 = vmul.f32 %v102, 0.6931472
  %v104 = vadd.f32 %v84, %v101
  %v105 = vadd.f32 %v87, %v103
  %v106 = vsub.f32 %v104, %v65
  %v107 = vsub.f32 %v105, %v68
  %v108 = vsel %vm56, %v106, 0.0
  %v109 = vsel %vm57, %v107, 0.0
  %vm110 = vcmask 7168
  %111 = vst.msk [vmem:[%s1] sm:$0xff] %vm110, %v108
  %112 = vst.msk [vmem:[%s1 + $0x8] sm:$0xff] %vm110, %v109
  // Predicated region
  $region6: #{simclr_forward_train.5} parent=0 // pred_check
    _
  $region7: #{simclr_forward_train.5} parent=0 // pred_check_branch
    %114 = sbr.rel (0) target = $region9
  $region8: #{simclr_forward_train.5} parent=0 // pred_region
    _
  $region9: #{simclr_forward_train.5} parent=0 // pred_fallthru
    _
  // Predicated region
  $region10: #{simclr_forward_train.5} parent=0 // pred_check
    _
  $region11: #{simclr_forward_train.5} parent=0 // pred_check_branch
    %116 = sbr.rel (0) target = $region13
  $region12: #{simclr_forward_train.5} parent=0 // pred_region
    _
  $region13: #{simclr_forward_train.5} parent=0 // pred_fallthru
    _

// kernel: simclr_forward_train.3
$region0: #{simclr_forward_train.3}
  #allocation0 [shape = 'u32[]', space=smem, size = 0x4, offset = 0x4, fixed_abs, tag = 'smem constant byte address 0x4 - core index']
  #allocation1 [shape = 'u32[72,128]{1,0:T(1,128)}', space=vmem, size = 0x9000, scoped, tag = 'internal scratch']
  %s0 = inlined_call_operand.vmem [shape: bf16[16,64,36], index: 0, kind: input, shape index: {}]
  %s1 = inlined_call_operand.vmem [shape: bf16[36,128], index: 1, kind: input, shape index: {}]
  %s2 = inlined_call_operand.vmem [shape: f32[1,128], index: 2, kind: input, shape index: {}]
  %s3 = inlined_call_operand.vmem [shape: f32[16,128], index: 3, kind: output, shape index: {}]
  %s4 = sld [smem:[#allocation0]]
  $region30: #{simclr_forward_train.3} parent=0
    _
  %s6 = ssub.s32 1, %s4
  %s7 = scalar_select 0, %s6, %s4
  // Predicated region
  $region2: #{simclr_forward_train.3} parent=0 // pred_check
    _
  $region3: #{simclr_forward_train.3} parent=0 // pred_check_branch
    %9 = sbr.rel (0) target = $region5
  $region4: #{simclr_forward_train.3} parent=0 // pred_region
    _
  $region5: #{simclr_forward_train.3} parent=0 // pred_fallthru
    _
  // Predicated region
  $region6: #{simclr_forward_train.3} parent=0 // pred_check
    _
  $region7: #{simclr_forward_train.3} parent=0 // pred_check_branch
    %11 = sbr.rel (0) target = $region9
  $region8: #{simclr_forward_train.3} parent=0 // pred_region
    _
  $region9: #{simclr_forward_train.3} parent=0 // pred_fallthru
    _
  // Predicated region
  $region10: #{simclr_forward_train.3} parent=0 // pred_check
    _
  $region11: #{simclr_forward_train.3} parent=0 // pred_check_branch
    %13 = sbr.rel (0) target = $region13
  $region12: #{simclr_forward_train.3} parent=0 // pred_region
    _
  $region13: #{simclr_forward_train.3} parent=0 // pred_fallthru
    _
  %p15 = scmp.eq.s32.totalorder 0, 0
  // Predicated region
  $region14: #{simclr_forward_train.3} parent=0 // pred_check
    %p16 = pneg %p15
  $region15: #{simclr_forward_train.3} parent=0 // pred_check_branch
    %18 = sbr.rel (%p16) target = $region17
  $region16: #{simclr_forward_train.3} parent=0 // pred_region
    %19 = vst [vmem:[%s3] sm:$0xff] 0.0
    %20 = vst [vmem:[%s3 + $0x8] sm:$0xff] 0.0
  $region17: #{simclr_forward_train.3} parent=0 // pred_fallthru
    _
  %v21 = vld [vmem:[%s0] sm:$0xf]
  %v22 = vld [vmem:[%s0 + $0x4] sm:$0xf]
  %v23 = vld [vmem:[%s0 + $0x8] sm:$0xf]
  %v24 = vld [vmem:[%s0 + $0xc] sm:$0xf]
  %v25 = vld [vmem:[%s0 + $0x10] sm:$0xf]
  %v26 = vld [vmem:[%s0 + $0x14] sm:$0xf]
  %v27 = vld [vmem:[%s0 + $0x18] sm:$0xf]
  %v28 = vld [vmem:[%s0 + $0x1c] sm:$0xf]
  %v29 = vld [vmem:[%s0 + $0x20] sm:$0xf]
  %v30 = vld [vmem:[%s0 + $0x24] sm:$0xf]
  %v31 = vld [vmem:[%s0 + $0x28] sm:$0xf]
  %v32 = vld [vmem:[%s0 + $0x2c] sm:$0xf]
  %v33 = vld [vmem:[%s0 + $0x30] sm:$0xf]
  %v34 = vld [vmem:[%s0 + $0x34] sm:$0xf]
  %v35 = vld [vmem:[%s0 + $0x38] sm:$0xf]
  %v36 = vld [vmem:[%s0 + $0x3c] sm:$0xf]
  %v37 = vld [vmem:[%s0 + $0x40] sm:$0xf]
  %v38 = vld [vmem:[%s0 + $0x44] sm:$0xf]
  %v39 = vld [vmem:[%s0 + $0x48] sm:$0xf]
  %v40 = vld [vmem:[%s0 + $0x4c] sm:$0xf]
  %v41 = vld [vmem:[%s0 + $0x50] sm:$0xf]
  %v42 = vld [vmem:[%s0 + $0x54] sm:$0xf]
  %v43 = vld [vmem:[%s0 + $0x58] sm:$0xf]
  %v44 = vld [vmem:[%s0 + $0x5c] sm:$0xf]
  %v45 = vld [vmem:[%s0 + $0x60] sm:$0xf]
  %v46 = vld [vmem:[%s0 + $0x64] sm:$0xf]
  %v47 = vld [vmem:[%s0 + $0x68] sm:$0xf]
  %v48 = vld [vmem:[%s0 + $0x6c] sm:$0xf]
  %v49 = vld [vmem:[%s0 + $0x70] sm:$0xf]
  %v50 = vld [vmem:[%s0 + $0x74] sm:$0xf]
  %v51 = vld [vmem:[%s0 + $0x78] sm:$0xf]
  %v52 = vld [vmem:[%s0 + $0x7c] sm:$0xf]
  %v53 = vld [vmem:[%s0 + $0x80] sm:$0xf]
  %v54 = vld [vmem:[%s0 + $0x84] sm:$0xf]
  %v55 = vld [vmem:[%s0 + $0x88] sm:$0xf]
  %v56 = vld [vmem:[%s0 + $0x8c] sm:$0xf]
  %v57 = vld [vmem:[%s0 + $0x90] sm:$0xf]
  %v58 = vld [vmem:[%s0 + $0x94] sm:$0xf]
  %v59 = vld [vmem:[%s0 + $0x98] sm:$0xf]
  %v60 = vld [vmem:[%s0 + $0x9c] sm:$0xf]
  %v61 = vld [vmem:[%s0 + $0xa0] sm:$0xf]
  %v62 = vld [vmem:[%s0 + $0xa4] sm:$0xf]
  %v63 = vld [vmem:[%s0 + $0xa8] sm:$0xf]
  %v64 = vld [vmem:[%s0 + $0xac] sm:$0xf]
  %v65 = vld [vmem:[%s0 + $0xb0] sm:$0xf]
  %v66 = vld [vmem:[%s0 + $0xb4] sm:$0xf]
  %v67 = vld [vmem:[%s0 + $0xb8] sm:$0xf]
  %v68 = vld [vmem:[%s0 + $0xbc] sm:$0xf]
  %v69 = vld [vmem:[%s0 + $0xc0] sm:$0xf]
  %v70 = vld [vmem:[%s0 + $0xc4] sm:$0xf]
  %v71 = vld [vmem:[%s0 + $0xc8] sm:$0xf]
  %v72 = vld [vmem:[%s0 + $0xcc] sm:$0xf]
  %v73 = vld [vmem:[%s0 + $0xd0] sm:$0xf]
  %v74 = vld [vmem:[%s0 + $0xd4] sm:$0xf]
  %v75 = vld [vmem:[%s0 + $0xd8] sm:$0xf]
  %v76 = vld [vmem:[%s0 + $0xdc] sm:$0xf]
  %v77 = vld [vmem:[%s0 + $0xe0] sm:$0xf]
  %v78 = vld [vmem:[%s0 + $0xe4] sm:$0xf]
  %v79 = vld [vmem:[%s0 + $0xe8] sm:$0xf]
  %v80 = vld [vmem:[%s0 + $0xec] sm:$0xf]
  %v81 = vld [vmem:[%s0 + $0xf0] sm:$0xf]
  %v82 = vld [vmem:[%s0 + $0xf4] sm:$0xf]
  %v83 = vld [vmem:[%s0 + $0xf8] sm:$0xf]
  %v84 = vld [vmem:[%s0 + $0xfc] sm:$0xf]
  %v85 = vld [vmem:[%s0 + $0x100] sm:$0xf]
  %v86 = vld [vmem:[%s0 + $0x104] sm:$0xf]
  %v87 = vld [vmem:[%s0 + $0x108] sm:$0xf]
  %v88 = vld [vmem:[%s0 + $0x10c] sm:$0xf]
  %v89 = vld [vmem:[%s0 + $0x110] sm:$0xf]
  %v90 = vld [vmem:[%s0 + $0x114] sm:$0xf]
  %v91 = vld [vmem:[%s0 + $0x118] sm:$0xf]
  %v92 = vld [vmem:[%s0 + $0x11c] sm:$0xf]
  %v93 = vld [vmem:[%s0 + $0x120] sm:$0xf]
  %v94 = vld [vmem:[%s0 + $0x124] sm:$0xf]
  %v95 = vld [vmem:[%s0 + $0x128] sm:$0xf]
  %v96 = vld [vmem:[%s0 + $0x12c] sm:$0xf]
  %v97 = vld [vmem:[%s0 + $0x130] sm:$0xf]
  %v98 = vld [vmem:[%s0 + $0x134] sm:$0xf]
  %v99 = vld [vmem:[%s0 + $0x138] sm:$0xf]
  %v100 = vld [vmem:[%s0 + $0x13c] sm:$0xf]
  %v101 = vld [vmem:[%s0 + $0x140] sm:$0xf]
  %v102 = vld [vmem:[%s0 + $0x144] sm:$0xf]
  %v103 = vld [vmem:[%s0 + $0x148] sm:$0xf]
  %v104 = vld [vmem:[%s0 + $0x14c] sm:$0xf]
  %v105 = vld [vmem:[%s0 + $0x150] sm:$0xf]
  %v106 = vld [vmem:[%s0 + $0x154] sm:$0xf]
  %v107 = vld [vmem:[%s0 + $0x158] sm:$0xf]
  %v108 = vld [vmem:[%s0 + $0x15c] sm:$0xf]
  %v109 = vld [vmem:[%s0 + $0x160] sm:$0xf]
  %v110 = vld [vmem:[%s0 + $0x164] sm:$0xf]
  %v111 = vld [vmem:[%s0 + $0x168] sm:$0xf]
  %v112 = vld [vmem:[%s0 + $0x16c] sm:$0xf]
  %v113 = vld [vmem:[%s0 + $0x170] sm:$0xf]
  %v114 = vld [vmem:[%s0 + $0x174] sm:$0xf]
  %v115 = vld [vmem:[%s0 + $0x178] sm:$0xf]
  %v116 = vld [vmem:[%s0 + $0x17c] sm:$0xf]
  %v117 = vld [vmem:[%s0 + $0x180] sm:$0xf]
  %v118 = vld [vmem:[%s0 + $0x184] sm:$0xf]
  %v119 = vld [vmem:[%s0 + $0x188] sm:$0xf]
  %v120 = vld [vmem:[%s0 + $0x18c] sm:$0xf]
  %v121 = vld [vmem:[%s0 + $0x190] sm:$0xf]
  %v122 = vld [vmem:[%s0 + $0x194] sm:$0xf]
  %v123 = vld [vmem:[%s0 + $0x198] sm:$0xf]
  %v124 = vld [vmem:[%s0 + $0x19c] sm:$0xf]
  %v125 = vld [vmem:[%s0 + $0x1a0] sm:$0xf]
  %v126 = vld [vmem:[%s0 + $0x1a4] sm:$0xf]
  %v127 = vld [vmem:[%s0 + $0x1a8] sm:$0xf]
  %v128 = vld [vmem:[%s0 + $0x1ac] sm:$0xf]
  %v129 = vld [vmem:[%s0 + $0x1b0] sm:$0xf]
  %v130 = vld [vmem:[%s0 + $0x1b4] sm:$0xf]
  %v131 = vld [vmem:[%s0 + $0x1b8] sm:$0xf]
  %v132 = vld [vmem:[%s0 + $0x1bc] sm:$0xf]
  %v133 = vld [vmem:[%s0 + $0x1c0] sm:$0xf]
  %v134 = vld [vmem:[%s0 + $0x1c4] sm:$0xf]
  %v135 = vld [vmem:[%s0 + $0x1c8] sm:$0xf]
  %v136 = vld [vmem:[%s0 + $0x1cc] sm:$0xf]
  %v137 = vld [vmem:[%s0 + $0x1d0] sm:$0xf]
  %v138 = vld [vmem:[%s0 + $0x1d4] sm:$0xf]
  %v139 = vld [vmem:[%s0 + $0x1d8] sm:$0xf]
  %v140 = vld [vmem:[%s0 + $0x1dc] sm:$0xf]
  %v141 = vld [vmem:[%s0 + $0x1e0] sm:$0xf]
  %v142 = vld [vmem:[%s0 + $0x1e4] sm:$0xf]
  %v143 = vld [vmem:[%s0 + $0x1e8] sm:$0xf]
  %v144 = vld [vmem:[%s0 + $0x1ec] sm:$0xf]
  %v145 = vld [vmem:[%s0 + $0x1f0] sm:$0xf]
  %v146 = vld [vmem:[%s0 + $0x1f4] sm:$0xf]
  %v147 = vld [vmem:[%s0 + $0x1f8] sm:$0xf]
  %v148 = vld [vmem:[%s0 + $0x1fc] sm:$0xf]
  %v149 = vld [vmem:[%s1] sm:$0xf]
  %v150 = vld [vmem:[%s1 + $0x4] sm:$0xf]
  %v151 = vld [vmem:[%s1 + $0x8] sm:$0xf]
  %v152 = vld [vmem:[%s1 + $0xc] sm:$0xf]
  %v153 = vld [vmem:[%s1 + $0x10] sm:$0x3]
  %v154 = vld [vmem:[%s2] sm:$0x1]
  %v156 = vperm.slane %v154, 0
  %v286 = vunpack.c.l.b16 %v21
  %v287 = vunpack.c.l.b16 %v22
  %v288 = vunpack.c.l.b16 %v23
  %v289 = vunpack.c.l.b16 %v24
  %v290 = vunpack.c.l.b16 %v25
  %v291 = vunpack.c.l.b16 %v26
  %v292 = vunpack.c.l.b16 %v27
  %v293 = vunpack.c.l.b16 %v28
  %v294 = vunpack.c.l.b16 %v29
  %v295 = vunpack.c.l.b16 %v30
  %v296 = vunpack.c.l.b16 %v31
  %v297 = vunpack.c.l.b16 %v32
  %v298 = vunpack.c.l.b16 %v33
  %v299 = vunpack.c.l.b16 %v34
  %v300 = vunpack.c.l.b16 %v35
  %v301 = vunpack.c.l.b16 %v36
  %v302 = vunpack.c.l.b16 %v37
  %v303 = vunpack.c.l.b16 %v38
  %v304 = vunpack.c.l.b16 %v39
  %v305 = vunpack.c.l.b16 %v40
  %v306 = vunpack.c.l.b16 %v41
  %v307 = vunpack.c.l.b16 %v42
  %v308 = vunpack.c.l.b16 %v43
  %v309 = vunpack.c.l.b16 %v44
  %v310 = vunpack.c.l.b16 %v45
  %v311 = vunpack.c.l.b16 %v46
  %v312 = vunpack.c.l.b16 %v47
  %v313 = vunpack.c.l.b16 %v48
  %v314 = vunpack.c.l.b16 %v49
  %v315 = vunpack.c.l.b16 %v50
  %v316 = vunpack.c.l.b16 %v51
  %v317 = vunpack.c.l.b16 %v52
  %v318 = vunpack.c.l.b16 %v53
  %v319 = vunpack.c.l.b16 %v54
  %v320 = vunpack.c.l.b16 %v55
  %v321 = vunpack.c.l.b16 %v56
  %v322 = vunpack.c.l.b16 %v57
  %v323 = vunpack.c.l.b16 %v58
  %v324 = vunpack.c.l.b16 %v59
  %v325 = vunpack.c.l.b16 %v60
  %v326 = vunpack.c.l.b16 %v61
  %v327 = vunpack.c.l.b16 %v62
  %v328 = vunpack.c.l.b16 %v63
  %v329 = vunpack.c.l.b16 %v64
  %v330 = vunpack.c.l.b16 %v65
  %v331 = vunpack.c.l.b16 %v66
  %v332 = vunpack.c.l.b16 %v67
  %v333 = vunpack.c.l.b16 %v68
  %v334 = vunpack.c.l.b16 %v69
  %v335 = vunpack.c.l.b16 %v70
  %v336 = vunpack.c.l.b16 %v71
  %v337 = vunpack.c.l.b16 %v72
  %v338 = vunpack.c.l.b16 %v73
  %v339 = vunpack.c.l.b16 %v74
  %v340 = vunpack.c.l.b16 %v75
  %v341 = vunpack.c.l.b16 %v76
  %v342 = vunpack.c.l.b16 %v77
  %v343 = vunpack.c.l.b16 %v78
  %v344 = vunpack.c.l.b16 %v79
  %v345 = vunpack.c.l.b16 %v80
  %v346 = vunpack.c.l.b16 %v81
  %v347 = vunpack.c.l.b16 %v82
  %v348 = vunpack.c.l.b16 %v83
  %v349 = vunpack.c.l.b16 %v84
  %v350 = vunpack.c.l.b16 %v85
  %v351 = vunpack.c.l.b16 %v86
  %v352 = vunpack.c.l.b16 %v87
  %v353 = vunpack.c.l.b16 %v88
  %v354 = vunpack.c.l.b16 %v89
  %v355 = vunpack.c.l.b16 %v90
  %v356 = vunpack.c.l.b16 %v91
  %v357 = vunpack.c.l.b16 %v92
  %v358 = vunpack.c.l.b16 %v93
  %v359 = vunpack.c.l.b16 %v94
  %v360 = vunpack.c.l.b16 %v95
  %v361 = vunpack.c.l.b16 %v96
  %v362 = vunpack.c.l.b16 %v97
  %v363 = vunpack.c.l.b16 %v98
  %v364 = vunpack.c.l.b16 %v99
  %v365 = vunpack.c.l.b16 %v100
  %v366 = vunpack.c.l.b16 %v101
  %v367 = vunpack.c.l.b16 %v102
  %v368 = vunpack.c.l.b16 %v103
  %v369 = vunpack.c.l.b16 %v104
  %v370 = vunpack.c.l.b16 %v105
  %v371 = vunpack.c.l.b16 %v106
  %v372 = vunpack.c.l.b16 %v107
  %v373 = vunpack.c.l.b16 %v108
  %v374 = vunpack.c.l.b16 %v109
  %v375 = vunpack.c.l.b16 %v110
  %v376 = vunpack.c.l.b16 %v111
  %v377 = vunpack.c.l.b16 %v112
  %v378 = vunpack.c.l.b16 %v113
  %v379 = vunpack.c.l.b16 %v114
  %v380 = vunpack.c.l.b16 %v115
  %v381 = vunpack.c.l.b16 %v116
  %v382 = vunpack.c.l.b16 %v117
  %v383 = vunpack.c.l.b16 %v118
  %v384 = vunpack.c.l.b16 %v119
  %v385 = vunpack.c.l.b16 %v120
  %v386 = vunpack.c.l.b16 %v121
  %v387 = vunpack.c.l.b16 %v122
  %v388 = vunpack.c.l.b16 %v123
  %v389 = vunpack.c.l.b16 %v124
  %v390 = vunpack.c.l.b16 %v125
  %v391 = vunpack.c.l.b16 %v126
  %v392 = vunpack.c.l.b16 %v127
  %v393 = vunpack.c.l.b16 %v128
  %v394 = vunpack.c.l.b16 %v129
  %v395 = vunpack.c.l.b16 %v130
  %v396 = vunpack.c.l.b16 %v131
  %v397 = vunpack.c.l.b16 %v132
  %v398 = vunpack.c.l.b16 %v133
  %v399 = vunpack.c.l.b16 %v134
  %v400 = vunpack.c.l.b16 %v135
  %v401 = vunpack.c.l.b16 %v136
  %v402 = vunpack.c.l.b16 %v137
  %v403 = vunpack.c.l.b16 %v138
  %v404 = vunpack.c.l.b16 %v139
  %v405 = vunpack.c.l.b16 %v140
  %v406 = vunpack.c.l.b16 %v141
  %v407 = vunpack.c.l.b16 %v142
  %v408 = vunpack.c.l.b16 %v143
  %v409 = vunpack.c.l.b16 %v144
  %v410 = vunpack.c.l.b16 %v145
  %v411 = vunpack.c.l.b16 %v146
  %v412 = vunpack.c.l.b16 %v147
  %v413 = vunpack.c.l.b16 %v148
  %v414 = vpack.c.b16 %v287, %v286
  %v415 = vpack.c.b16 %v289, %v288
  %v416 = vpack.c.b16 %v291, %v290
  %v417 = vpack.c.b16 %v293, %v292
  %v418 = vpack.c.b16 %v295, %v294
  %v419 = vpack.c.b16 %v297, %v296
  %v420 = vpack.c.b16 %v299, %v298
  %v421 = vpack.c.b16 %v301, %v300
  %v422 = vpack.c.b16 %v303, %v302
  %v423 = vpack.c.b16 %v305, %v304
  %v424 = vpack.c.b16 %v307, %v306
  %v425 = vpack.c.b16 %v309, %v308
  %v426 = vpack.c.b16 %v311, %v310
  %v427 = vpack.c.b16 %v313, %v312
  %v428 = vpack.c.b16 %v315, %v314
  %v429 = vpack.c.b16 %v317, %v316
  %v430 = vpack.c.b16 %v319, %v318
  %v431 = vpack.c.b16 %v321, %v320
  %v432 = vpack.c.b16 %v323, %v322
  %v433 = vpack.c.b16 %v325, %v324
  %v434 = vpack.c.b16 %v327, %v326
  %v435 = vpack.c.b16 %v329, %v328
  %v436 = vpack.c.b16 %v331, %v330
  %v437 = vpack.c.b16 %v333, %v332
  %v438 = vpack.c.b16 %v335, %v334
  %v439 = vpack.c.b16 %v337, %v336
  %v440 = vpack.c.b16 %v339, %v338
  %v441 = vpack.c.b16 %v341, %v340
  %v442 = vpack.c.b16 %v343, %v342
  %v443 = vpack.c.b16 %v345, %v344
  %v444 = vpack.c.b16 %v347, %v346
  %v445 = vpack.c.b16 %v349, %v348
  %v446 = vpack.c.b16 %v351, %v350
  %v447 = vpack.c.b16 %v353, %v352
  %v448 = vpack.c.b16 %v355, %v354
  %v449 = vpack.c.b16 %v357, %v356
  %v450 = vpack.c.b16 %v359, %v358
  %v451 = vpack.c.b16 %v361, %v360
  %v452 = vpack.c.b16 %v363, %v362
  %v453 = vpack.c.b16 %v365, %v364
  %v454 = vpack.c.b16 %v367, %v366
  %v455 = vpack.c.b16 %v369, %v368
  %v456 = vpack.c.b16 %v371, %v370
  %v457 = vpack.c.b16 %v373, %v372
  %v458 = vpack.c.b16 %v375, %v374
  %v459 = vpack.c.b16 %v377, %v376
  %v460 = vpack.c.b16 %v379, %v378
  %v461 = vpack.c.b16 %v381, %v380
  %v462 = vpack.c.b16 %v383, %v382
  %v463 = vpack.c.b16 %v385, %v384
  %v464 = vpack.c.b16 %v387, %v386
  %v465 = vpack.c.b16 %v389, %v388
  %v466 = vpack.c.b16 %v391, %v390
  %v467 = vpack.c.b16 %v393, %v392
  %v468 = vpack.c.b16 %v395, %v394
  %v469 = vpack.c.b16 %v397, %v396
  %v470 = vpack.c.b16 %v399, %v398
  %v471 = vpack.c.b16 %v401, %v400
  %v472 = vpack.c.b16 %v403, %v402
  %v473 = vpack.c.b16 %v405, %v404
  %v474 = vpack.c.b16 %v407, %v406
  %v475 = vpack.c.b16 %v409, %v408
  %v476 = vpack.c.b16 %v411, %v410
  %v477 = vpack.c.b16 %v413, %v412
  %v483 = vunpack.c.l.b16 %v149
  %v484 = vunpack.c.l.b16 %v150
  %v485 = vunpack.c.l.b16 %v151
  %v486 = vunpack.c.l.b16 %v152
  %v487 = vunpack.c.l.b16 %v153
  %v488 = vpack.c.b16 %v484, %v483
  %v489 = vpack.c.b16 %v486, %v485
  %v490 = vpack.c.b16 %v487, %v487
  %vm493 = vcmask 293888
  %v495 = vsel %vm493, %v414, 0
  %v498 = vsel %vm493, %v415, 0
  %v501 = vsel %vm493, %v416, 0
  %v504 = vsel %vm493, %v417, 0
  %v507 = vsel %vm493, %v418, 0
  %v510 = vsel %vm493, %v419, 0
  %v513 = vsel %vm493, %v420, 0
  %v516 = vsel %vm493, %v421, 0
  %v519 = vsel %vm493, %v422, 0
  %v522 = vsel %vm493, %v423, 0
  %v525 = vsel %vm493, %v424, 0
  %v528 = vsel %vm493, %v425, 0
  %v531 = vsel %vm493, %v426, 0
  %v534 = vsel %vm493, %v427, 0
  %v537 = vsel %vm493, %v428, 0
  %v540 = vsel %vm493, %v429, 0
  %v543 = vsel %vm493, %v430, 0
  %v546 = vsel %vm493, %v431, 0
  %v549 = vsel %vm493, %v432, 0
  %v552 = vsel %vm493, %v433, 0
  %v555 = vsel %vm493, %v434, 0
  %v558 = vsel %vm493, %v435, 0
  %v561 = vsel %vm493, %v436, 0
  %v564 = vsel %vm493, %v437, 0
  %v567 = vsel %vm493, %v438, 0
  %v570 = vsel %vm493, %v439, 0
  %v573 = vsel %vm493, %v440, 0
  %v576 = vsel %vm493, %v441, 0
  %v579 = vsel %vm493, %v442, 0
  %v582 = vsel %vm493, %v443, 0
  %v585 = vsel %vm493, %v444, 0
  %v588 = vsel %vm493, %v445, 0
  %v591 = vsel %vm493, %v446, 0
  %v594 = vsel %vm493, %v447, 0
  %v597 = vsel %vm493, %v448, 0
  %v600 = vsel %vm493, %v449, 0
  %v603 = vsel %vm493, %v450, 0
  %v606 = vsel %vm493, %v451, 0
  %v609 = vsel %vm493, %v452, 0
  %v612 = vsel %vm493, %v453, 0
  %v615 = vsel %vm493, %v454, 0
  %v618 = vsel %vm493, %v455, 0
  %v621 = vsel %vm493, %v456, 0
  %v624 = vsel %vm493, %v457, 0
  %v627 = vsel %vm493, %v458, 0
  %v630 = vsel %vm493, %v459, 0
  %v633 = vsel %vm493, %v460, 0
  %v636 = vsel %vm493, %v461, 0
  %v639 = vsel %vm493, %v462, 0
  %v642 = vsel %vm493, %v463, 0
  %v645 = vsel %vm493, %v464, 0
  %v648 = vsel %vm493, %v465, 0
  %v651 = vsel %vm493, %v466, 0
  %v654 = vsel %vm493, %v467, 0
  %v657 = vsel %vm493, %v468, 0
  %v660 = vsel %vm493, %v469, 0
  %v663 = vsel %vm493, %v470, 0
  %v666 = vsel %vm493, %v471, 0
  %v669 = vsel %vm493, %v472, 0
  %v672 = vsel %vm493, %v473, 0
  %v675 = vsel %vm493, %v474, 0
  %v678 = vsel %vm493, %v475, 0
  %v681 = vsel %vm493, %v476, 0
  %v684 = vsel %vm493, %v477, 0
  %vm686 = vcmask 1041408
  %v688 = vsel %vm686, %v490, 0
  %690 = vmatpush.bf16.msra.mxu0 0
  %691 = vmatpush.bf16.msra.mxu0 0
  %692 = vmatpush.bf16.msra.mxu0 0
  %693 = vmatpush.bf16.msra.mxu0 0
  %694 = vmatpush.bf16.msra.mxu0 0
  %695 = vmatpush.bf16.msra.mxu0 %v688
  %696 = vmatpush.bf16.msra.mxu0 %v489
  %697 = vmatpush.bf16.msra.mxu0 %v488
  %698 = vmatmul.bf16.gmra.mxu0 %v495
  %v699 = vpop.f32.mrf.mxu0
  %v700 = vadd.f32 %v156, %v699
  %v701 = vpop.f32.mrf.mxu0
  %v702 = vadd.f32 %v156, %v701
  %703 = vmatmul.bf16.gmra.mxu0 %v498
  %v704 = vpop.f32.mrf.mxu0
  %v705 = vadd.f32 %v156, %v704
  %v706 = vpop.f32.mrf.mxu0
  %v707 = vadd.f32 %v156, %v706
  %708 = vmatmul.bf16.gmra.mxu0 %v501
  %v709 = vpop.f32.mrf.mxu0
  %v710 = vadd.f32 %v156, %v709
  %v711 = vpop.f32.mrf.mxu0
  %v712 = vadd.f32 %v156, %v711
  %713 = vmatmul.bf16.gmra.mxu0 %v504
  %v714 = vpop.f32.mrf.mxu0
  %v715 = vadd.f32 %v156, %v714
  %v716 = vpop.f32.mrf.mxu0
  %v717 = vadd.f32 %v156, %v716
  %718 = vmatmul.bf16.gmra.mxu0 %v507
  %v719 = vpop.f32.mrf.mxu0
  %v720 = vadd.f32 %v156, %v719
  %v721 = vpop.f32.mrf.mxu0
  %v722 = vadd.f32 %v156, %v721
  %723 = vmatmul.bf16.gmra.mxu0 %v510
  %v724 = vpop.f32.mrf.mxu0
  %v725 = vadd.f32 %v156, %v724
  %v726 = vpop.f32.mrf.mxu0
  %v727 = vadd.f32 %v156, %v726
  %728 = vmatmul.bf16.gmra.mxu0 %v513
  %v729 = vpop.f32.mrf.mxu0
  %v730 = vadd.f32 %v156, %v729
  %v731 = vpop.f32.mrf.mxu0
  %v732 = vadd.f32 %v156, %v731
  %733 = vmatmul.bf16.gmra.mxu0 %v516
  %v734 = vpop.f32.mrf.mxu0
  %v735 = vadd.f32 %v156, %v734
  %v736 = vpop.f32.mrf.mxu0
  %v737 = vadd.f32 %v156, %v736
  %738 = vmatmul.bf16.gmra.mxu0 %v519
  %v739 = vpop.f32.mrf.mxu0
  %v740 = vadd.f32 %v156, %v739
  %v741 = vpop.f32.mrf.mxu0
  %v742 = vadd.f32 %v156, %v741
  %743 = vmatmul.bf16.gmra.mxu0 %v522
  %v744 = vpop.f32.mrf.mxu0
  %v745 = vadd.f32 %v156, %v744
  %v746 = vpop.f32.mrf.mxu0
  %v747 = vadd.f32 %v156, %v746
  %748 = vmatmul.bf16.gmra.mxu0 %v525
  %v749 = vpop.f32.mrf.mxu0
  %v750 = vadd.f32 %v156, %v749
  %v751 = vpop.f32.mrf.mxu0
  %v752 = vadd.f32 %v156, %v751
  %753 = vmatmul.bf16.gmra.mxu0 %v528
  %v754 = vpop.f32.mrf.mxu0
  %v755 = vadd.f32 %v156, %v754
  %v756 = vpop.f32.mrf.mxu0
  %v757 = vadd.f32 %v156, %v756
  %758 = vmatmul.bf16.gmra.mxu0 %v531
  %v759 = vpop.f32.mrf.mxu0
  %v760 = vadd.f32 %v156, %v759
  %v761 = vpop.f32.mrf.mxu0
  %v762 = vadd.f32 %v156, %v761
  %763 = vmatmul.bf16.gmra.mxu0 %v534
  %v764 = vpop.f32.mrf.mxu0
  %v765 = vadd.f32 %v156, %v764
  %v766 = vpop.f32.mrf.mxu0
  %v767 = vadd.f32 %v156, %v766
  %768 = vmatmul.bf16.gmra.mxu0 %v537
  %v769 = vpop.f32.mrf.mxu0
  %v770 = vadd.f32 %v156, %v769
  %v771 = vpop.f32.mrf.mxu0
  %v772 = vadd.f32 %v156, %v771
  %773 = vmatmul.bf16.gmra.mxu0 %v540
  %v774 = vpop.f32.mrf.mxu0
  %v775 = vadd.f32 %v156, %v774
  %v776 = vpop.f32.mrf.mxu0
  %v777 = vadd.f32 %v156, %v776
  %778 = vmatmul.bf16.gmra.mxu0 %v543
  %v779 = vpop.f32.mrf.mxu0
  %v780 = vadd.f32 %v156, %v779
  %v781 = vpop.f32.mrf.mxu0
  %v782 = vadd.f32 %v156, %v781
  %783 = vmatmul.bf16.gmra.mxu0 %v546
  %v784 = vpop.f32.mrf.mxu0
  %v785 = vadd.f32 %v156, %v784
  %v786 = vpop.f32.mrf.mxu0
  %v787 = vadd.f32 %v156, %v786
  %788 = vmatmul.bf16.gmra.mxu0 %v549
  %v789 = vpop.f32.mrf.mxu0
  %v790 = vadd.f32 %v156, %v789
  %v791 = vpop.f32.mrf.mxu0
  %v792 = vadd.f32 %v156, %v791
  %793 = vmatmul.bf16.gmra.mxu0 %v552
  %v794 = vpop.f32.mrf.mxu0
  %v795 = vadd.f32 %v156, %v794
  %v796 = vpop.f32.mrf.mxu0
  %v797 = vadd.f32 %v156, %v796
  %798 = vmatmul.bf16.gmra.mxu0 %v555
  %v799 = vpop.f32.mrf.mxu0
  %v800 = vadd.f32 %v156, %v799
  %v801 = vpop.f32.mrf.mxu0
  %v802 = vadd.f32 %v156, %v801
  %803 = vmatmul.bf16.gmra.mxu0 %v558
  %v804 = vpop.f32.mrf.mxu0
  %v805 = vadd.f32 %v156, %v804
  %v806 = vpop.f32.mrf.mxu0
  %v807 = vadd.f32 %v156, %v806
  %808 = vmatmul.bf16.gmra.mxu0 %v561
  %v809 = vpop.f32.mrf.mxu0
  %v810 = vadd.f32 %v156, %v809
  %v811 = vpop.f32.mrf.mxu0
  %v812 = vadd.f32 %v156, %v811
  %813 = vmatmul.bf16.gmra.mxu0 %v564
  %v814 = vpop.f32.mrf.mxu0
  %v815 = vadd.f32 %v156, %v814
  %v816 = vpop.f32.mrf.mxu0
  %v817 = vadd.f32 %v156, %v816
  %818 = vmatmul.bf16.gmra.mxu0 %v567
  %v819 = vpop.f32.mrf.mxu0
  %v820 = vadd.f32 %v156, %v819
  %v821 = vpop.f32.mrf.mxu0
  %v822 = vadd.f32 %v156, %v821
  %823 = vmatmul.bf16.gmra.mxu0 %v570
  %v824 = vpop.f32.mrf.mxu0
  %v825 = vadd.f32 %v156, %v824
  %v826 = vpop.f32.mrf.mxu0
  %v827 = vadd.f32 %v156, %v826
  %828 = vmatmul.bf16.gmra.mxu0 %v573
  %v829 = vpop.f32.mrf.mxu0
  %v830 = vadd.f32 %v156, %v829
  %v831 = vpop.f32.mrf.mxu0
  %v832 = vadd.f32 %v156, %v831
  %833 = vmatmul.bf16.gmra.mxu0 %v576
  %v834 = vpop.f32.mrf.mxu0
  %v835 = vadd.f32 %v156, %v834
  %v836 = vpop.f32.mrf.mxu0
  %v837 = vadd.f32 %v156, %v836
  %838 = vmatmul.bf16.gmra.mxu0 %v579
  %v839 = vpop.f32.mrf.mxu0
  %v840 = vadd.f32 %v156, %v839
  %v841 = vpop.f32.mrf.mxu0
  %v842 = vadd.f32 %v156, %v841
  %843 = vmatmul.bf16.gmra.mxu0 %v582
  %v844 = vpop.f32.mrf.mxu0
  %v845 = vadd.f32 %v156, %v844
  %v846 = vpop.f32.mrf.mxu0
  %v847 = vadd.f32 %v156, %v846
  %848 = vmatmul.bf16.gmra.mxu0 %v585
  %v849 = vpop.f32.mrf.mxu0
  %v850 = vadd.f32 %v156, %v849
  %v851 = vpop.f32.mrf.mxu0
  %v852 = vadd.f32 %v156, %v851
  %853 = vmatmul.bf16.gmra.mxu0 %v588
  %v854 = vpop.f32.mrf.mxu0
  %v855 = vadd.f32 %v156, %v854
  %v856 = vpop.f32.mrf.mxu0
  %v857 = vadd.f32 %v156, %v856
  %858 = vmatmul.bf16.gmra.mxu0 %v591
  %v859 = vpop.f32.mrf.mxu0
  %v860 = vadd.f32 %v156, %v859
  %v861 = vpop.f32.mrf.mxu0
  %v862 = vadd.f32 %v156, %v861
  %863 = vmatmul.bf16.gmra.mxu0 %v594
  %v864 = vpop.f32.mrf.mxu0
  %v865 = vadd.f32 %v156, %v864
  %v866 = vpop.f32.mrf.mxu0
  %v867 = vadd.f32 %v156, %v866
  %868 = vmatmul.bf16.gmra.mxu0 %v597
  %v869 = vpop.f32.mrf.mxu0
  %v870 = vadd.f32 %v156, %v869
  %v871 = vpop.f32.mrf.mxu0
  %v872 = vadd.f32 %v156, %v871
  %873 = vmatmul.bf16.gmra.mxu0 %v600
  %v874 = vpop.f32.mrf.mxu0
  %v875 = vadd.f32 %v156, %v874
  %v876 = vpop.f32.mrf.mxu0
  %v877 = vadd.f32 %v156, %v876
  %878 = vmatmul.bf16.gmra.mxu0 %v603
  %v879 = vpop.f32.mrf.mxu0
  %v880 = vadd.f32 %v156, %v879
  %v881 = vpop.f32.mrf.mxu0
  %v882 = vadd.f32 %v156, %v881
  %883 = vmatmul.bf16.gmra.mxu0 %v606
  %v884 = vpop.f32.mrf.mxu0
  %v885 = vadd.f32 %v156, %v884
  %v886 = vpop.f32.mrf.mxu0
  %v887 = vadd.f32 %v156, %v886
  %888 = vmatmul.bf16.gmra.mxu0 %v609
  %v889 = vpop.f32.mrf.mxu0
  %v890 = vadd.f32 %v156, %v889
  %v891 = vpop.f32.mrf.mxu0
  %v892 = vadd.f32 %v156, %v891
  %893 = vmatmul.bf16.gmra.mxu0 %v612
  %v894 = vpop.f32.mrf.mxu0
  %v895 = vadd.f32 %v156, %v894
  %v896 = vpop.f32.mrf.mxu0
  %v897 = vadd.f32 %v156, %v896
  %898 = vmatmul.bf16.gmra.mxu0 %v615
  %v899 = vpop.f32.mrf.mxu0
  %v900 = vadd.f32 %v156, %v899
  %v901 = vpop.f32.mrf.mxu0
  %v902 = vadd.f32 %v156, %v901
  %903 = vmatmul.bf16.gmra.mxu0 %v618
  %v904 = vpop.f32.mrf.mxu0
  %v905 = vadd.f32 %v156, %v904
  %v906 = vpop.f32.mrf.mxu0
  %v907 = vadd.f32 %v156, %v906
  %908 = vmatmul.bf16.gmra.mxu0 %v621
  %v909 = vpop.f32.mrf.mxu0
  %v910 = vadd.f32 %v156, %v909
  %v911 = vpop.f32.mrf.mxu0
  %v912 = vadd.f32 %v156, %v911
  %913 = vmatmul.bf16.gmra.mxu0 %v624
  %v914 = vpop.f32.mrf.mxu0
  %v915 = vadd.f32 %v156, %v914
  %v916 = vpop.f32.mrf.mxu0
  %v917 = vadd.f32 %v156, %v916
  %918 = vmatmul.bf16.gmra.mxu0 %v627
  %v919 = vpop.f32.mrf.mxu0
  %v920 = vadd.f32 %v156, %v919
  %v921 = vpop.f32.mrf.mxu0
  %v922 = vadd.f32 %v156, %v921
  %923 = vmatmul.bf16.gmra.mxu0 %v630
  %v924 = vpop.f32.mrf.mxu0
  %v925 = vadd.f32 %v156, %v924
  %v926 = vpop.f32.mrf.mxu0
  %v927 = vadd.f32 %v156, %v926
  %928 = vmatmul.bf16.gmra.mxu0 %v633
  %v929 = vpop.f32.mrf.mxu0
  %v930 = vadd.f32 %v156, %v929
  %v931 = vpop.f32.mrf.mxu0
  %v932 = vadd.f32 %v156, %v931
  %933 = vmatmul.bf16.gmra.mxu0 %v636
  %v934 = vpop.f32.mrf.mxu0
  %v935 = vadd.f32 %v156, %v934
  %v936 = vpop.f32.mrf.mxu0
  %v937 = vadd.f32 %v156, %v936
  %938 = vmatmul.bf16.gmra.mxu0 %v639
  %v939 = vpop.f32.mrf.mxu0
  %v940 = vadd.f32 %v156, %v939
  %v941 = vpop.f32.mrf.mxu0
  %v942 = vadd.f32 %v156, %v941
  %943 = vmatmul.bf16.gmra.mxu0 %v642
  %v944 = vpop.f32.mrf.mxu0
  %v945 = vadd.f32 %v156, %v944
  %v946 = vpop.f32.mrf.mxu0
  %v947 = vadd.f32 %v156, %v946
  %948 = vmatmul.bf16.gmra.mxu0 %v645
  %v949 = vpop.f32.mrf.mxu0
  %v950 = vadd.f32 %v156, %v949
  %v951 = vpop.f32.mrf.mxu0
  %v952 = vadd.f32 %v156, %v951
  %953 = vmatmul.bf16.gmra.mxu0 %v648
  %v954 = vpop.f32.mrf.mxu0
  %v955 = vadd.f32 %v156, %v954
  %v956 = vpop.f32.mrf.mxu0
  %v957 = vadd.f32 %v156, %v956
  %958 = vmatmul.bf16.gmra.mxu0 %v651
  %v959 = vpop.f32.mrf.mxu0
  %v960 = vadd.f32 %v156, %v959
  %v961 = vpop.f32.mrf.mxu0
  %v962 = vadd.f32 %v156, %v961
  %963 = vmatmul.bf16.gmra.mxu0 %v654
  %v964 = vpop.f32.mrf.mxu0
  %v965 = vadd.f32 %v156, %v964
  %v966 = vpop.f32.mrf.mxu0
  %v967 = vadd.f32 %v156, %v966
  %968 = vmatmul.bf16.gmra.mxu0 %v657
  %v969 = vpop.f32.mrf.mxu0
  %v970 = vadd.f32 %v156, %v969
  %v971 = vpop.f32.mrf.mxu0
  %v972 = vadd.f32 %v156, %v971
  %973 = vmatmul.bf16.gmra.mxu0 %v660
  %v974 = vpop.f32.mrf.mxu0
  %v975 = vadd.f32 %v156, %v974
  %v976 = vpop.f32.mrf.mxu0
  %v977 = vadd.f32 %v156, %v976
  %978 = vmatmul.bf16.gmra.mxu0 %v663
  %v979 = vpop.f32.mrf.mxu0
  %v980 = vadd.f32 %v156, %v979
  %v981 = vpop.f32.mrf.mxu0
  %v982 = vadd.f32 %v156, %v981
  %983 = vmatmul.bf16.gmra.mxu0 %v666
  %v984 = vpop.f32.mrf.mxu0
  %v985 = vadd.f32 %v156, %v984
  %v986 = vpop.f32.mrf.mxu0
  %v987 = vadd.f32 %v156, %v986
  %988 = vmatmul.bf16.gmra.mxu0 %v669
  %v989 = vpop.f32.mrf.mxu0
  %v990 = vadd.f32 %v156, %v989
  %v991 = vpop.f32.mrf.mxu0
  %v992 = vadd.f32 %v156, %v991
  %993 = vmatmul.bf16.gmra.mxu0 %v672
  %v994 = vpop.f32.mrf.mxu0
  %v995 = vadd.f32 %v156, %v994
  %v996 = vpop.f32.mrf.mxu0
  %v997 = vadd.f32 %v156, %v996
  %998 = vmatmul.bf16.gmra.mxu0 %v675
  %v999 = vpop.f32.mrf.mxu0
  %v1000 = vadd.f32 %v156, %v999
  %v1001 = vpop.f32.mrf.mxu0
  %v1002 = vadd.f32 %v156, %v1001
  %1003 = vmatmul.bf16.gmra.mxu0 %v678
  %v1004 = vpop.f32.mrf.mxu0
  %v1005 = vadd.f32 %v156, %v1004
  %v1006 = vpop.f32.mrf.mxu0
  %v1007 = vadd.f32 %v156, %v1006
  %1008 = vmatmul.bf16.gmra.mxu0 %v681
  %v1009 = vpop.f32.mrf.mxu0
  %v1010 = vadd.f32 %v156, %v1009
  %v1011 = vpop.f32.mrf.mxu0
  %v1012 = vadd.f32 %v156, %v1011
  %1013 = vmatmul.bf16.gmra.mxu0 %v684
  %v1014 = vpop.f32.mrf.mxu0
  %v1015 = vadd.f32 %v156, %v1014
  %v1016 = vpop.f32.mrf.mxu0
  %v1017 = vadd.f32 %v156, %v1016
  %1018 = vdwg.mxu0
  %v1019 = vmax.f32 %v700, 0.0
  %v1020 = vmax.f32 %v702, 0.0
  %v1021 = vmax.f32 %v705, 0.0
  %v1022 = vmax.f32 %v707, 0.0
  %v1023 = vmax.f32 %v710, 0.0
  %v1024 = vmax.f32 %v712, 0.0
  %v1025 = vmax.f32 %v715, 0.0
  %v1026 = vmax.f32 %v717, 0.0
  %v1027 = vmax.f32 %v720, 0.0
  %v1028 = vmax.f32 %v722, 0.0
  %v1029 = vmax.f32 %v725, 0.0
  %v1030 = vmax.f32 %v727, 0.0
  %v1031 = vmax.f32 %v730, 0.0
  %v1032 = vmax.f32 %v732, 0.0
  %v1033 = vmax.f32 %v735, 0.0
  %v1034 = vmax.f32 %v737, 0.0
  %v1035 = vmax.f32 %v740, 0.0
  %v1036 = vmax.f32 %v742, 0.0
  %v1037 = vmax.f32 %v745, 0.0
  %v1038 = vmax.f32 %v747, 0.0
  %v1039 = vmax.f32 %v750, 0.0
  %v1040 = vmax.f32 %v752, 0.0
  %v1041 = vmax.f32 %v755, 0.0
  %v1042 = vmax.f32 %v757, 0.0
  %v1043 = vmax.f32 %v760, 0.0
  %v1044 = vmax.f32 %v762, 0.0
  %v1045 = vmax.f32 %v765, 0.0
  %v1046 = vmax.f32 %v767, 0.0
  %v1047 = vmax.f32 %v770, 0.0
  %v1048 = vmax.f32 %v772, 0.0
  %v1049 = vmax.f32 %v775, 0.0
  %v1050 = vmax.f32 %v777, 0.0
  %v1051 = vmax.f32 %v780, 0.0
  %v1052 = vmax.f32 %v782, 0.0
  %v1053 = vmax.f32 %v785, 0.0
  %v1054 = vmax.f32 %v787, 0.0
  %v1055 = vmax.f32 %v790, 0.0
  %v1056 = vmax.f32 %v792, 0.0
  %v1057 = vmax.f32 %v795, 0.0
  %v1058 = vmax.f32 %v797, 0.0
  %v1059 = vmax.f32 %v800, 0.0
  %v1060 = vmax.f32 %v802, 0.0
  %v1061 = vmax.f32 %v805, 0.0
  %v1062 = vmax.f32 %v807, 0.0
  %v1063 = vmax.f32 %v810, 0.0
  %v1064 = vmax.f32 %v812, 0.0
  %v1065 = vmax.f32 %v815, 0.0
  %v1066 = vmax.f32 %v817, 0.0
  %v1067 = vmax.f32 %v820, 0.0
  %v1068 = vmax.f32 %v822, 0.0
  %v1069 = vmax.f32 %v825, 0.0
  %v1070 = vmax.f32 %v827, 0.0
  %v1071 = vmax.f32 %v830, 0.0
  %v1072 = vmax.f32 %v832, 0.0
  %v1073 = vmax.f32 %v835, 0.0
  %v1074 = vmax.f32 %v837, 0.0
  %v1075 = vmax.f32 %v840, 0.0
  %v1076 = vmax.f32 %v842, 0.0
  %v1077 = vmax.f32 %v845, 0.0
  %v1078 = vmax.f32 %v847, 0.0
  %v1079 = vmax.f32 %v850, 0.0
  %v1080 = vmax.f32 %v852, 0.0
  %v1081 = vmax.f32 %v855, 0.0
  %v1082 = vmax.f32 %v857, 0.0
  %v1083 = vmax.f32 %v860, 0.0
  %v1084 = vmax.f32 %v862, 0.0
  %v1085 = vmax.f32 %v865, 0.0
  %v1086 = vmax.f32 %v867, 0.0
  %v1087 = vmax.f32 %v870, 0.0
  %v1088 = vmax.f32 %v872, 0.0
  %v1089 = vmax.f32 %v875, 0.0
  %v1090 = vmax.f32 %v877, 0.0
  %v1091 = vmax.f32 %v880, 0.0
  %v1092 = vmax.f32 %v882, 0.0
  %v1093 = vmax.f32 %v885, 0.0
  %v1094 = vmax.f32 %v887, 0.0
  %v1095 = vmax.f32 %v890, 0.0
  %v1096 = vmax.f32 %v892, 0.0
  %v1097 = vmax.f32 %v895, 0.0
  %v1098 = vmax.f32 %v897, 0.0
  %v1099 = vmax.f32 %v900, 0.0
  %v1100 = vmax.f32 %v902, 0.0
  %v1101 = vmax.f32 %v905, 0.0
  %v1102 = vmax.f32 %v907, 0.0
  %v1103 = vmax.f32 %v910, 0.0
  %v1104 = vmax.f32 %v912, 0.0
  %v1105 = vmax.f32 %v915, 0.0
  %v1106 = vmax.f32 %v917, 0.0
  %v1107 = vmax.f32 %v920, 0.0
  %v1108 = vmax.f32 %v922, 0.0
  %v1109 = vmax.f32 %v925, 0.0
  %v1110 = vmax.f32 %v927, 0.0
  %v1111 = vmax.f32 %v930, 0.0
  %v1112 = vmax.f32 %v932, 0.0
  %v1113 = vmax.f32 %v935, 0.0
  %v1114 = vmax.f32 %v937, 0.0
  %v1115 = vmax.f32 %v940, 0.0
  %v1116 = vmax.f32 %v942, 0.0
  %v1117 = vmax.f32 %v945, 0.0
  %v1118 = vmax.f32 %v947, 0.0
  %v1119 = vmax.f32 %v950, 0.0
  %v1120 = vmax.f32 %v952, 0.0
  %v1121 = vmax.f32 %v955, 0.0
  %v1122 = vmax.f32 %v957, 0.0
  %v1123 = vmax.f32 %v960, 0.0
  %v1124 = vmax.f32 %v962, 0.0
  %v1125 = vmax.f32 %v965, 0.0
  %v1126 = vmax.f32 %v967, 0.0
  %v1127 = vmax.f32 %v970, 0.0
  %v1128 = vmax.f32 %v972, 0.0
  %v1129 = vmax.f32 %v975, 0.0
  %v1130 = vmax.f32 %v977, 0.0
  %v1131 = vmax.f32 %v980, 0.0
  %v1132 = vmax.f32 %v982, 0.0
  %v1133 = vmax.f32 %v985, 0.0
  %v1134 = vmax.f32 %v987, 0.0
  %v1135 = vmax.f32 %v990, 0.0
  %v1136 = vmax.f32 %v992, 0.0
  %v1137 = vmax.f32 %v995, 0.0
  %v1138 = vmax.f32 %v997, 0.0
  %v1139 = vmax.f32 %v1000, 0.0
  %v1140 = vmax.f32 %v1002, 0.0
  %v1141 = vmax.f32 %v1005, 0.0
  %v1142 = vmax.f32 %v1007, 0.0
  %v1143 = vmax.f32 %v1010, 0.0
  %v1144 = vmax.f32 %v1012, 0.0
  %v1145 = vmax.f32 %v1015, 0.0
  %v1146 = vmax.f32 %v1017, 0.0
  %v1147 = vld [vmem:[%s3] sm:$0xff]
  %v1148 = vld [vmem:[%s3 + $0x8] sm:$0xff]
  %v1149 = vadd.f32 %v1019, %v1020
  %v1150 = vadd.f32 %v1149, %v1021
  %v1151 = vadd.f32 %v1150, %v1022
  %v1152 = vadd.f32 %v1151, %v1023
  %v1153 = vadd.f32 %v1152, %v1024
  %v1154 = vadd.f32 %v1153, %v1025
  %v1155 = vadd.f32 %v1154, %v1026
  %v1156 = vrot.slane %v1155, 4
  %v1157 = vadd.f32 %v1155, %v1156
  %v1158 = vrot.slane %v1157, 2
  %v1159 = vadd.f32 %v1157, %v1158
  %v1160 = vrot.slane %v1159, 1
  %v1161 = vadd.f32 %v1159, %v1160
  %v1162 = vadd.f32 %v1027, %v1028
  %v1163 = vadd.f32 %v1162, %v1029
  %v1164 = vadd.f32 %v1163, %v1030
  %v1165 = vadd.f32 %v1164, %v1031
  %v1166 = vadd.f32 %v1165, %v1032
  %v1167 = vadd.f32 %v1166, %v1033
  %v1168 = vadd.f32 %v1167, %v1034
  %v1169 = vrot.slane %v1168, 4
  %v1170 = vadd.f32 %v1168, %v1169
  %v1171 = vrot.slane %v1170, 2
  %v1172 = vadd.f32 %v1170, %v1171
  %v1173 = vrot.slane %v1172, 1
  %v1174 = vadd.f32 %v1172, %v1173
  %v1175 = vadd.f32 %v1035, %v1036
  %v1176 = vadd.f32 %v1175, %v1037
  %v1177 = vadd.f32 %v1176, %v1038
  %v1178 = vadd.f32 %v1177, %v1039
  %v1179 = vadd.f32 %v1178, %v1040
  %v1180 = vadd.f32 %v1179, %v1041
  %v1181 = vadd.f32 %v1180, %v1042
  %v1182 = vrot.slane %v1181, 4
  %v1183 = vadd.f32 %v1181, %v1182
  %v1184 = vrot.slane %v1183, 2
  %v1185 = vadd.f32 %v1183, %v1184
  %v1186 = vrot.slane %v1185, 1
  %v1187 = vadd.f32 %v1185, %v1186
  %v1188 = vadd.f32 %v1043, %v1044
  %v1189 = vadd.f32 %v1188, %v1045
  %v1190 = vadd.f32 %v1189, %v1046
  %v1191 = vadd.f32 %v1190, %v1047
  %v1192 = vadd.f32 %v1191, %v1048
  %v1193 = vadd.f32 %v1192, %v1049
  %v1194 = vadd.f32 %v1193, %v1050
  %v1195 = vrot.slane %v1194, 4
  %v1196 = vadd.f32 %v1194, %v1195
  %v1197 = vrot.slane %v1196, 2
  %v1198 = vadd.f32 %v1196, %v1197
  %v1199 = vrot.slane %v1198, 1
  %v1200 = vadd.f32 %v1198, %v1199
  %v1201 = vadd.f32 %v1051, %v1052
  %v1202 = vadd.f32 %v1201, %v1053
  %v1203 = vadd.f32 %v1202, %v1054
  %v1204 = vadd.f32 %v1203, %v1055
  %v1205 = vadd.f32 %v1204, %v1056
  %v1206 = vadd.f32 %v1205, %v1057
  %v1207 = vadd.f32 %v1206, %v1058
  %v1208 = vrot.slane %v1207, 4
  %v1209 = vadd.f32 %v1207, %v1208
  %v1210 = vrot.slane %v1209, 2
  %v1211 = vadd.f32 %v1209, %v1210
  %v1212 = vrot.slane %v1211, 1
  %v1213 = vadd.f32 %v1211, %v1212
  %v1214 = vadd.f32 %v1059, %v1060
  %v1215 = vadd.f32 %v1214, %v1061
  %v1216 = vadd.f32 %v1215, %v1062
  %v1217 = vadd.f32 %v1216, %v1063
  %v1218 = vadd.f32 %v1217, %v1064
  %v1219 = vadd.f32 %v1218, %v1065
  %v1220 = vadd.f32 %v1219, %v1066
  %v1221 = vrot.slane %v1220, 4
  %v1222 = vadd.f32 %v1220, %v1221
  %v1223 = vrot.slane %v1222, 2
  %v1224 = vadd.f32 %v1222, %v1223
  %v1225 = vrot.slane %v1224, 1
  %v1226 = vadd.f32 %v1224, %v1225
  %v1227 = vadd.f32 %v1067, %v1068
  %v1228 = vadd.f32 %v1227, %v1069
  %v1229 = vadd.f32 %v1228, %v1070
  %v1230 = vadd.f32 %v1229, %v1071
  %v1231 = vadd.f32 %v1230, %v1072
  %v1232 = vadd.f32 %v1231, %v1073
  %v1233 = vadd.f32 %v1232, %v1074
  %v1234 = vrot.slane %v1233, 4
  %v1235 = vadd.f32 %v1233, %v1234
  %v1236 = vrot.slane %v1235, 2
  %v1237 = vadd.f32 %v1235, %v1236
  %v1238 = vrot.slane %v1237, 1
  %v1239 = vadd.f32 %v1237, %v1238
  %v1240 = vadd.f32 %v1075, %v1076
  %v1241 = vadd.f32 %v1240, %v1077
  %v1242 = vadd.f32 %v1241, %v1078
  %v1243 = vadd.f32 %v1242, %v1079
  %v1244 = vadd.f32 %v1243, %v1080
  %v1245 = vadd.f32 %v1244, %v1081
  %v1246 = vadd.f32 %v1245, %v1082
  %v1247 = vrot.slane %v1246, 4
  %v1248 = vadd.f32 %v1246, %v1247
  %v1249 = vrot.slane %v1248, 2
  %v1250 = vadd.f32 %v1248, %v1249
  %v1251 = vrot.slane %v1250, 1
  %v1252 = vadd.f32 %v1250, %v1251
  %v1253 = vadd.f32 %v1083, %v1084
  %v1254 = vadd.f32 %v1253, %v1085
  %v1255 = vadd.f32 %v1254, %v1086
  %v1256 = vadd.f32 %v1255, %v1087
  %v1257 = vadd.f32 %v1256, %v1088
  %v1258 = vadd.f32 %v1257, %v1089
  %v1259 = vadd.f32 %v1258, %v1090
  %v1260 = vrot.slane %v1259, 4
  %v1261 = vadd.f32 %v1259, %v1260
  %v1262 = vrot.slane %v1261, 2
  %v1263 = vadd.f32 %v1261, %v1262
  %v1264 = vrot.slane %v1263, 1
  %v1265 = vadd.f32 %v1263, %v1264
  %v1266 = vadd.f32 %v1091, %v1092
  %v1267 = vadd.f32 %v1266, %v1093
  %v1268 = vadd.f32 %v1267, %v1094
  %v1269 = vadd.f32 %v1268, %v1095
  %v1270 = vadd.f32 %v1269, %v1096
  %v1271 = vadd.f32 %v1270, %v1097
  %v1272 = vadd.f32 %v1271, %v1098
  %v1273 = vrot.slane %v1272, 4
  %v1274 = vadd.f32 %v1272, %v1273
  %v1275 = vrot.slane %v1274, 2
  %v1276 = vadd.f32 %v1274, %v1275
  %v1277 = vrot.slane %v1276, 1
  %v1278 = vadd.f32 %v1276, %v1277
  %v1279 = vadd.f32 %v1099, %v1100
  %v1280 = vadd.f32 %v1279, %v1101
  %v1281 = vadd.f32 %v1280, %v1102
  %v1282 = vadd.f32 %v1281, %v1103
  %v1283 = vadd.f32 %v1282, %v1104
  %v1284 = vadd.f32 %v1283, %v1105
  %v1285 = vadd.f32 %v1284, %v1106
  %v1286 = vrot.slane %v1285, 4
  %v1287 = vadd.f32 %v1285, %v1286
  %v1288 = vrot.slane %v1287, 2
  %v1289 = vadd.f32 %v1287, %v1288
  %v1290 = vrot.slane %v1289, 1
  %v1291 = vadd.f32 %v1289, %v1290
  %v1292 = vadd.f32 %v1107, %v1108
  %v1293 = vadd.f32 %v1292, %v1109
  %v1294 = vadd.f32 %v1293, %v1110
  %v1295 = vadd.f32 %v1294, %v1111
  %v1296 = vadd.f32 %v1295, %v1112
  %v1297 = vadd.f32 %v1296, %v1113
  %v1298 = vadd.f32 %v1297, %v1114
  %v1299 = vrot.slane %v1298, 4
  %v1300 = vadd.f32 %v1298, %v1299
  %v1301 = vrot.slane %v1300, 2
  %v1302 = vadd.f32 %v1300, %v1301
  %v1303 = vrot.slane %v1302, 1
  %v1304 = vadd.f32 %v1302, %v1303
  %v1305 = vadd.f32 %v1115, %v1116
  %v1306 = vadd.f32 %v1305, %v1117
  %v1307 = vadd.f32 %v1306, %v1118
  %v1308 = vadd.f32 %v1307, %v1119
  %v1309 = vadd.f32 %v1308, %v1120
  %v1310 = vadd.f32 %v1309, %v1121
  %v1311 = vadd.f32 %v1310, %v1122
  %v1312 = vrot.slane %v1311, 4
  %v1313 = vadd.f32 %v1311, %v1312
  %v1314 = vrot.slane %v1313, 2
  %v1315 = vadd.f32 %v1313, %v1314
  %v1316 = vrot.slane %v1315, 1
  %v1317 = vadd.f32 %v1315, %v1316
  %v1318 = vadd.f32 %v1123, %v1124
  %v1319 = vadd.f32 %v1318, %v1125
  %v1320 = vadd.f32 %v1319, %v1126
  %v1321 = vadd.f32 %v1320, %v1127
  %v1322 = vadd.f32 %v1321, %v1128
  %v1323 = vadd.f32 %v1322, %v1129
  %v1324 = vadd.f32 %v1323, %v1130
  %v1325 = vrot.slane %v1324, 4
  %v1326 = vadd.f32 %v1324, %v1325
  %v1327 = vrot.slane %v1326, 2
  %v1328 = vadd.f32 %v1326, %v1327
  %v1329 = vrot.slane %v1328, 1
  %v1330 = vadd.f32 %v1328, %v1329
  %v1331 = vadd.f32 %v1131, %v1132
  %v1332 = vadd.f32 %v1331, %v1133
  %v1333 = vadd.f32 %v1332, %v1134
  %v1334 = vadd.f32 %v1333, %v1135
  %v1335 = vadd.f32 %v1334, %v1136
  %v1336 = vadd.f32 %v1335, %v1137
  %v1337 = vadd.f32 %v1336, %v1138
  %v1338 = vrot.slane %v1337, 4
  %v1339 = vadd.f32 %v1337, %v1338
  %v1340 = vrot.slane %v1339, 2
  %v1341 = vadd.f32 %v1339, %v1340
  %v1342 = vrot.slane %v1341, 1
  %v1343 = vadd.f32 %v1341, %v1342
  %v1344 = vadd.f32 %v1139, %v1140
  %v1345 = vadd.f32 %v1344, %v1141
  %v1346 = vadd.f32 %v1345, %v1142
  %v1347 = vadd.f32 %v1346, %v1143
  %v1348 = vadd.f32 %v1347, %v1144
  %v1349 = vadd.f32 %v1348, %v1145
  %v1350 = vadd.f32 %v1349, %v1146
  %v1351 = vrot.slane %v1350, 4
  %v1352 = vadd.f32 %v1350, %v1351
  %v1353 = vrot.slane %v1352, 2
  %v1354 = vadd.f32 %v1352, %v1353
  %v1355 = vrot.slane %v1354, 1
  %v1356 = vadd.f32 %v1354, %v1355
  %vm1373 = vcmask 1041409
  %v1374 = vsel %vm1373, %v1174, %v1161
  %vm1375 = vcmask 1042434
  %v1376 = vsel %vm1375, %v1187, %v1374
  %vm1377 = vcmask 1043459
  %v1378 = vsel %vm1377, %v1200, %v1376
  %vm1379 = vcmask 1044484
  %v1380 = vsel %vm1379, %v1213, %v1378
  %vm1381 = vcmask 1045509
  %v1382 = vsel %vm1381, %v1226, %v1380
  %vm1383 = vcmask 1046534
  %v1384 = vsel %vm1383, %v1239, %v1382
  %vm1385 = vcmask 1047559
  %v1386 = vsel %vm1385, %v1252, %v1384
  %v1387 = vsel %vm1373, %v1278, %v1265
  %v1388 = vsel %vm1375, %v1291, %v1387
  %v1389 = vsel %vm1377, %v1304, %v1388
  %v1390 = vsel %vm1379, %v1317, %v1389
  %v1391 = vsel %vm1381, %v1330, %v1390
  %v1392 = vsel %vm1383, %v1343, %v1391
  %v1393 = vsel %vm1385, %v1356, %v1392
  %v1396 = vadd.f32 %v1147, %v1386
  %v1397 = vadd.f32 %v1148, %v1393
  %1398 = vst [vmem:[%s3] sm:$0xff] %v1396
  %1399 = vst [vmem:[%s3 + $0x8] sm:$0xff] %v1397
  // Predicated region
  $region18: #{simclr_forward_train.3} parent=0 // pred_check
    %p1400 = pneg %p15
  $region19: #{simclr_forward_train.3} parent=0 // pred_check_branch
    %1402 = sbr.rel (%p1400) target = $region21
  $region20: #{simclr_forward_train.3} parent=0 // pred_region
    %v1403 = vld [vmem:[%s3] sm:$0xff]
    %v1404 = vld [vmem:[%s3 + $0x8] sm:$0xff]
    %v1405 = vmul.f32 %v1403, 0.015625
    %v1406 = vmul.f32 %v1404, 0.015625
    %1407 = vst [vmem:[%s3] sm:$0xff] %v1405
    %1408 = vst [vmem:[%s3 + $0x8] sm:$0xff] %v1406
  $region21: #{simclr_forward_train.3} parent=0 // pred_fallthru
    _
  // Predicated region
  $region22: #{simclr_forward_train.3} parent=0 // pred_check
    _
  $region23: #{simclr_forward_train.3} parent=0 // pred_check_branch
    %1410 = sbr.rel (0) target = $region25
  $region24: #{simclr_forward_train.3} parent=0 // pred_region
    _
  $region25: #{simclr_forward_train.3} parent=0 // pred_fallthru
    _
  // Predicated region
  $region26: #{simclr_forward_train.3} parent=0 // pred_check
    _
  $region27: #{simclr_forward_train.3} parent=0 // pred_check_branch
    %1412 = sbr.rel (0) target = $region29
  $region28: #{simclr_forward_train.3} parent=0 // pred_region
    _
  $region29: #{simclr_forward_train.3} parent=0 // pred_fallthru
    _

</llo_original>
